<compile_context>
chip_gen: v7x
topology: tpu7x:2x2x1
jax: 0.10.0
libtpu: 0.0.40
codegen_flags: <defaults>
</compile_context>

<pallas_src>
import math
import jax
import jax.numpy as jnp
from jax import lax
from jax.experimental import pallas as pl
from jax.experimental.pallas import tpu as pltpu

N_EMBD = 32
N_HEAD = 4
HEAD_DIM = N_EMBD // N_HEAD
BLOCK_SIZE = 8          # sequence length T == block_size
ADAPTER_SIZE = 16
LN_EPS = 1e-5
F32_MIN = float(jnp.finfo(jnp.float32).min)


def _layernorm(h, w, b):
    mu = jnp.mean(h, axis=-1, keepdims=True)
    var = jnp.mean((h - mu) ** 2, axis=-1, keepdims=True)
    return (h - mu) * lax.rsqrt(var + LN_EPS) * w + b


def _bdot(a, w_bf16):
    # bf16 operands feed the MXU natively on v6e/v7x; accumulate in f32.
    return jnp.dot(a.astype(jnp.bfloat16), w_bf16,
                   preferred_element_type=jnp.float32)


def block_kernel(x_ref, mask_ref, w1_ref, w2_ref, bias_ref, out_ref):
    BB, T, C = x_ref.shape
    H, D, A = N_HEAD, HEAD_DIM, ADAPTER_SIZE
    M = BB * T

    x = x_ref[...].reshape(M, C)      # (M, C) f32; rows = (batch, time)
    mask = mask_ref[...]              # (BB, T, T) additive mask: 0 keep / f32min drop

    w1 = w1_ref[...]                  # (4, C, 4C)  bf16 weight slab (K = C)
    w2 = w2_ref[...]                  # (2, 4C, C)  bf16 weight slab
    bias = bias_ref[...]              # (12, 4C)    f32 LN / bias slab

    w_qkv = w1[0, :, :3 * C]
    w_ap = w1[1, :, :C]
    w_fc = w1[2]
    w_dn = w1[3, :, :A]
    w_mp = w2[0]
    w_up = w2[1, :A, :]

    ln1_w, ln1_b = bias[0:1, :C], bias[1:2, :C]
    b_qkv = bias[2:3, :3 * C]
    b_ap = bias[3:4, :C]
    ln2_w, ln2_b = bias[4:5, :C], bias[5:6, :C]
    b_fc = bias[6:7, :]
    b_mp = bias[7:8, :C]
    ln3_w, ln3_b = bias[8:9, :C], bias[9:10, :C]
    b_dn = bias[10:11, :A]
    b_up = bias[11:12, :C]

    # ---------- attention: x + c_proj(softmax(scale*q k^T + mask) v) -------
    h1 = _layernorm(x, ln1_w, ln1_b)
    qkv = (_bdot(h1, w_qkv) + b_qkv).reshape(BB, T, 3 * C)

    def head_major(base):
        # gather lane range [base, base+C) into head-major batch (H*BB, T, D)
        return jnp.concatenate(
            [qkv[:, :, base + hh * D: base + (hh + 1) * D] for hh in range(H)],
            axis=0)

    q3 = head_major(0).astype(jnp.bfloat16)
    k3 = head_major(C).astype(jnp.bfloat16)
    v3 = head_major(2 * C).astype(jnp.bfloat16)

    scale = jnp.float32(1.0 / math.sqrt(D))
    att = jnp.einsum("bqd,bkd->bqk", q3, k3,
                     preferred_element_type=jnp.float32) * scale   # (H*BB,T,T)
    att = att + jnp.concatenate([mask] * H, axis=0)                # causal+pad
    att = att - jnp.max(att, axis=-1, keepdims=True)
    e = jnp.exp(att)
    p = e * pl.reciprocal(jnp.sum(e, axis=-1, keepdims=True), approx=True)
    y3 = jnp.einsum("bqk,bkd->bqd", p.astype(jnp.bfloat16), v3,
                    preferred_element_type=jnp.float32)            # (H*BB,T,D)
    y = jnp.concatenate([y3[hh * BB:(hh + 1) * BB] for hh in range(H)],
                        axis=-1)                                   # (BB,T,C)
    y = _bdot(y.reshape(M, C), w_ap) + b_ap
    x1 = x + y

    # ---------- MLP: x + c_proj(gelu(c_fc(ln_2(x)))) ------------------------
    h2 = _layernorm(x1, ln2_w, ln2_b)
    f = _bdot(h2, w_fc) + b_fc
    g = 0.5 * f * (1.0 + lax.erf(f * jnp.float32(1.0 / math.sqrt(2.0))))
    x2 = x1 + _bdot(g, w_mp) + b_mp

    # ---------- Adapter: x + up(relu(down(ln_3(x)))) ------------------------
    h3 = _layernorm(x2, ln3_w, ln3_b)
    d = jnp.maximum(_bdot(h3, w_dn) + b_dn, 0.0)
    x3 = x2 + _bdot(d, w_up) + b_up

    out_ref[...] = x3.reshape(BB, T, C)


def _pack_params(params):
    C, A = N_EMBD, ADAPTER_SIZE
    w1 = jnp.zeros((4, C, 4 * C), jnp.float32)
    w1 = w1.at[0, :, :3 * C].set(params["w_qkv"])
    w1 = w1.at[1, :, :C].set(params["w_ap"])
    w1 = w1.at[2, :, :].set(params["w_fc"])
    w1 = w1.at[3, :, :A].set(params["w_dn"])
    w2 = jnp.zeros((2, 4 * C, C), jnp.float32)
    w2 = w2.at[0].set(params["w_mp"])
    w2 = w2.at[1, :A, :].set(params["w_up"])
    rows = [("ln1_w", C), ("ln1_b", C), ("b_qkv", 3 * C), ("b_ap", C),
            ("ln2_w", C), ("ln2_b", C), ("b_fc", 4 * C), ("b_mp", C),
            ("ln3_w", C), ("ln3_b", C), ("b_dn", A), ("b_up", C)]
    bias = jnp.zeros((12, 4 * C), jnp.float32)
    for i, (name, width) in enumerate(rows):
        bias = bias.at[i, :width].set(params[name].reshape(-1))
    return w1.astype(jnp.bfloat16), w2.astype(jnp.bfloat16), bias


def _pick_b_blk(B):
    # Largest divisor of B that is <= 64 while keeping >= 2 grid steps
    # (v7x has 2 TensorCores) whenever B >= 2.
    best = 1
    for d in range(1, min(B, 64) + 1):
        if B % d == 0 and (B // d >= 2 or B == 1):
            best = d
    return best


def block_forward(x, pad_mask, params, b_blk=None):
    B, T, C = x.shape
    w1, w2, bias = _pack_params(params)

    # additive mask: 0 where causal AND pad-valid, f32-min elsewhere
    causal = jnp.tril(jnp.ones((T, T), jnp.float32))[None]         # (1,T,T)
    keep = causal * pad_mask[:, 0]                                 # (B,T,T)
    add_mask = jnp.where(keep != 0, 0.0, F32_MIN).astype(jnp.float32)

    if b_blk is None:
        b_blk = _pick_b_blk(B)
    assert B % b_blk == 0
    grid = (B // b_blk,)

    in_specs = [
        pl.BlockSpec((b_blk, T, C), lambda i: (i, 0, 0)),          # x
        pl.BlockSpec((b_blk, T, T), lambda i: (i, 0, 0)),          # additive mask
        pl.BlockSpec((4, C, 4 * C), lambda i: (0, 0, 0)),          # weight slab 1
        pl.BlockSpec((2, 4 * C, C), lambda i: (0, 0, 0)),          # weight slab 2
        pl.BlockSpec((12, 4 * C), lambda i: (0, 0)),               # LN / bias slab
    ]
    return pl.pallas_call(
        block_kernel,
        out_shape=jax.ShapeDtypeStruct((B, T, C), jnp.float32),
        grid=grid,
        in_specs=in_specs,
        out_specs=pl.BlockSpec((b_blk, T, C), lambda i: (i, 0, 0)),
        compiler_params=pltpu.CompilerParams(
            dimension_semantics=("parallel",)),
    )(x, add_mask, w1, w2, bias)


# ----------------------- pure-JAX reference (mirrors PyTorch) --------------
def block_reference(x, pad_mask, p):
    B, T, C = x.shape

    def ln(h, w, b):
        mu = h.mean(-1, keepdims=True)
        var = ((h - mu) ** 2).mean(-1, keepdims=True)
        return (h - mu) / jnp.sqrt(var + LN_EPS) * w + b

    h = ln(x, p["ln1_w"], p["ln1_b"])
    qkv = h @ p["w_qkv"] + p["b_qkv"]
    q, k, v = jnp.split(qkv, 3, axis=-1)

    def heads(a):
        return a.reshape(B, T, N_HEAD, HEAD_DIM).transpose(0, 2, 1, 3)

    q, k, v = heads(q), heads(k), heads(v)
    att = (q @ k.transpose(0, 1, 3, 2)) * (1.0 / math.sqrt(HEAD_DIM))
    causal = jnp.tril(jnp.ones((T, T), jnp.float32))[None, None]
    att = jnp.where(causal == 0, -jnp.inf, att)
    att = jnp.where(pad_mask == 0, -jnp.inf, att)
    att = jnp.nan_to_num(att)
    att = att - jnp.max(att, axis=-1, keepdims=True)
    att = jnp.exp(att)
    att = att / jnp.sum(att, axis=-1, keepdims=True)
    y = (att @ v).transpose(0, 2, 1, 3).reshape(B, T, C)
    y = y @ p["w_ap"] + p["b_ap"]
    x1 = x + y

    h2 = ln(x1, p["ln2_w"], p["ln2_b"])
    f = h2 @ p["w_fc"] + p["b_fc"]
    g = 0.5 * f * (1.0 + lax.erf(f / jnp.sqrt(2.0)))
    x2 = x1 + g @ p["w_mp"] + p["b_mp"]

    h3 = ln(x2, p["ln3_w"], p["ln3_b"])
    d = jnp.maximum(h3 @ p["w_dn"] + p["b_dn"], 0.0)
    return x2 + d @ p["w_up"] + p["b_up"]


def make_params(key):
    C, A = N_EMBD, ADAPTER_SIZE
    keys = iter(jax.random.split(key, 40))

    def nxt():
        return next(keys)

    def lin(fan_in, fan_out):
        w = 0.02 * jax.random.normal(nxt(), (fan_in, fan_out), jnp.float32)
        b = 0.02 * jax.random.normal(nxt(), (1, fan_out), jnp.float32)
        return w, b

    def lnp():
        w = 1.0 + 0.1 * jax.random.normal(nxt(), (1, C), jnp.float32)
        b = 0.1 * jax.random.normal(nxt(), (1, C), jnp.float32)
        return w, b

    p = {}
    p["ln1_w"], p["ln1_b"] = lnp()
    p["w_qkv"], p["b_qkv"] = lin(C, 3 * C)
    p["w_ap"], p["b_ap"] = lin(C, C)
    p["ln2_w"], p["ln2_b"] = lnp()
    p["w_fc"], p["b_fc"] = lin(C, 4 * C)
    p["w_mp"], p["b_mp"] = lin(4 * C, C)
    p["ln3_w"], p["ln3_b"] = lnp()
    p["w_dn"], p["b_dn"] = lin(C, A)
    p["w_up"], p["b_up"] = lin(A, C)
    return p


if __name__ == "__main__":
    B, T, C = 4, BLOCK_SIZE, N_EMBD
    root = jax.random.PRNGKey(0)
    kp, kx = jax.random.split(root)

    params = make_params(kp)
    x = jax.random.normal(kx, (B, T, C), jnp.float32)

    # pad mask: batches 0/2 fully valid, batch 1 last 2 tokens padded,
    # batch 3 last 3 tokens padded
    tok_mask = jnp.ones((B, T), jnp.float32)
    tok_mask = tok_mask.at[1, -2:].set(0.0).at[3, -3:].set(0.0)
    pad_mask = tok_mask[:, None, :, None] * tok_mask[:, None, None, :]  # (B,1,T,T)

    out = block_forward(x, pad_mask, params)
    jax.block_until_ready(out)

    ref = block_reference(x, pad_mask, params)
    err = float(jnp.max(jnp.abs(out - ref)))
    assert jnp.allclose(out, ref, atol=3e-3, rtol=1e-2), f"max abs err {err}"

    print("KERNEL_OK")
</pallas_src>

<mosaic_0001>
module attributes {stable_mosaic.version = 11 : i64} {
  func.func @block_kernel(%arg0: i32, %arg1: memref<2x8x32xf32, #tpu.memory_space<vmem>>, %arg2: memref<2x8x8xf32, #tpu.memory_space<vmem>>, %arg3: memref<4x32x128xbf16, #tpu.memory_space<vmem>>, %arg4: memref<2x128x32xbf16, #tpu.memory_space<vmem>>, %arg5: memref<12x128xf32, #tpu.memory_space<vmem>>, %arg6: memref<2x8x32xf32, #tpu.memory_space<vmem>>) attributes {dimension_semantics = [#tpu.dimension_semantics<parallel>], iteration_bounds = array<i64: 2>, scalar_prefetch = 0 : i64, scratch_operands = 0 : i64, tpu.core_type = #tpu.core_type<tc>, window_params = [{transform_indices = @transform_0, window_bounds = array<i64: 2, 8, 32>}, {transform_indices = @transform_1, window_bounds = array<i64: 2, 8, 8>}, {pipeline_mode = #tpu.pipeline_mode<synchronous>, transform_indices = @transform_2, window_bounds = array<i64: 4, 32, 128>}, {pipeline_mode = #tpu.pipeline_mode<synchronous>, transform_indices = @transform_3, window_bounds = array<i64: 2, 128, 32>}, {pipeline_mode = #tpu.pipeline_mode<synchronous>, transform_indices = @transform_4, window_bounds = array<i64: 12, 128>}, {transform_indices = @transform_5, window_bounds = array<i64: 2, 8, 32>}]} {
    %c0 = arith.constant 0 : index
    %c0_0 = arith.constant 0 : index
    %c0_1 = arith.constant 0 : index
    %0 = vector.load %arg1[%c0, %c0_0, %c0_1] : memref<2x8x32xf32, #tpu.memory_space<vmem>>, vector<2x8x32xf32>
    %1 = vector.shape_cast %0 : vector<2x8x32xf32> to vector<16x32xf32>
    %c0_2 = arith.constant 0 : index
    %c0_3 = arith.constant 0 : index
    %c0_4 = arith.constant 0 : index
    %2 = vector.load %arg2[%c0_2, %c0_3, %c0_4] : memref<2x8x8xf32, #tpu.memory_space<vmem>>, vector<2x8x8xf32>
    %c0_5 = arith.constant 0 : index
    %c0_6 = arith.constant 0 : index
    %c0_7 = arith.constant 0 : index
    %3 = vector.load %arg3[%c0_5, %c0_6, %c0_7] : memref<4x32x128xbf16, #tpu.memory_space<vmem>>, vector<4x32x128xbf16>
    %c0_8 = arith.constant 0 : index
    %c0_9 = arith.constant 0 : index
    %c0_10 = arith.constant 0 : index
    %4 = vector.load %arg4[%c0_8, %c0_9, %c0_10] : memref<2x128x32xbf16, #tpu.memory_space<vmem>>, vector<2x128x32xbf16>
    %c0_11 = arith.constant 0 : index
    %c0_12 = arith.constant 0 : index
    %5 = vector.load %arg5[%c0_11, %c0_12] : memref<12x128xf32, #tpu.memory_space<vmem>>, vector<12x128xf32>
    %6 = vector.extract_strided_slice %3 {offsets = [0, 0, 0], sizes = [1, 32, 96], strides = [1, 1, 1]} : vector<4x32x128xbf16> to vector<1x32x96xbf16>
    %7 = vector.shape_cast %6 : vector<1x32x96xbf16> to vector<32x96xbf16>
    %8 = vector.extract_strided_slice %3 {offsets = [1, 0, 0], sizes = [1, 32, 32], strides = [1, 1, 1]} : vector<4x32x128xbf16> to vector<1x32x32xbf16>
    %9 = vector.shape_cast %8 : vector<1x32x32xbf16> to vector<32x32xbf16>
    %10 = vector.extract_strided_slice %3 {offsets = [2, 0, 0], sizes = [1, 32, 128], strides = [1, 1, 1]} : vector<4x32x128xbf16> to vector<1x32x128xbf16>
    %11 = vector.shape_cast %10 : vector<1x32x128xbf16> to vector<32x128xbf16>
    %12 = vector.extract_strided_slice %3 {offsets = [3, 0, 0], sizes = [1, 32, 16], strides = [1, 1, 1]} : vector<4x32x128xbf16> to vector<1x32x16xbf16>
    %13 = vector.shape_cast %12 : vector<1x32x16xbf16> to vector<32x16xbf16>
    %14 = vector.extract_strided_slice %4 {offsets = [0, 0, 0], sizes = [1, 128, 32], strides = [1, 1, 1]} : vector<2x128x32xbf16> to vector<1x128x32xbf16>
    %15 = vector.shape_cast %14 : vector<1x128x32xbf16> to vector<128x32xbf16>
    %16 = vector.extract_strided_slice %4 {offsets = [1, 0, 0], sizes = [1, 16, 32], strides = [1, 1, 1]} : vector<2x128x32xbf16> to vector<1x16x32xbf16>
    %17 = vector.shape_cast %16 : vector<1x16x32xbf16> to vector<16x32xbf16>
    %18 = vector.extract_strided_slice %5 {offsets = [0, 0], sizes = [1, 32], strides = [1, 1]} : vector<12x128xf32> to vector<1x32xf32>
    %19 = vector.extract_strided_slice %5 {offsets = [1, 0], sizes = [1, 32], strides = [1, 1]} : vector<12x128xf32> to vector<1x32xf32>
    %20 = vector.extract_strided_slice %5 {offsets = [2, 0], sizes = [1, 96], strides = [1, 1]} : vector<12x128xf32> to vector<1x96xf32>
    %21 = vector.extract_strided_slice %5 {offsets = [3, 0], sizes = [1, 32], strides = [1, 1]} : vector<12x128xf32> to vector<1x32xf32>
    %22 = vector.extract_strided_slice %5 {offsets = [4, 0], sizes = [1, 32], strides = [1, 1]} : vector<12x128xf32> to vector<1x32xf32>
    %23 = vector.extract_strided_slice %5 {offsets = [5, 0], sizes = [1, 32], strides = [1, 1]} : vector<12x128xf32> to vector<1x32xf32>
    %24 = vector.extract_strided_slice %5 {offsets = [6, 0], sizes = [1, 128], strides = [1, 1]} : vector<12x128xf32> to vector<1x128xf32>
    %25 = vector.extract_strided_slice %5 {offsets = [7, 0], sizes = [1, 32], strides = [1, 1]} : vector<12x128xf32> to vector<1x32xf32>
    %26 = vector.extract_strided_slice %5 {offsets = [8, 0], sizes = [1, 32], strides = [1, 1]} : vector<12x128xf32> to vector<1x32xf32>
    %27 = vector.extract_strided_slice %5 {offsets = [9, 0], sizes = [1, 32], strides = [1, 1]} : vector<12x128xf32> to vector<1x32xf32>
    %28 = vector.extract_strided_slice %5 {offsets = [10, 0], sizes = [1, 16], strides = [1, 1]} : vector<12x128xf32> to vector<1x16xf32>
    %29 = vector.extract_strided_slice %5 {offsets = [11, 0], sizes = [1, 32], strides = [1, 1]} : vector<12x128xf32> to vector<1x32xf32>
    %cst = arith.constant dense<0.000000e+00> : vector<16xf32>
    %30 = vector.multi_reduction <add>, %1, %cst [1] : vector<16x32xf32> to vector<16xf32>
    %31 = vector.shape_cast %30 : vector<16xf32> to vector<16x1xf32>
    %cst_13 = arith.constant 3.200000e+01 : f32
    %32 = vector.broadcast %cst_13 : f32 to vector<16x1xf32>
    %33 = arith.divf %31, %32 : vector<16x1xf32>
    %34 = vector.broadcast %33 : vector<16x1xf32> to vector<16x32xf32>
    %35 = arith.subf %1, %34 : vector<16x32xf32>
    %36 = arith.mulf %35, %35 : vector<16x32xf32>
    %cst_14 = arith.constant dense<0.000000e+00> : vector<16xf32>
    %37 = vector.multi_reduction <add>, %36, %cst_14 [1] : vector<16x32xf32> to vector<16xf32>
    %38 = vector.shape_cast %37 : vector<16xf32> to vector<16x1xf32>
    %cst_15 = arith.constant 3.200000e+01 : f32
    %39 = vector.broadcast %cst_15 : f32 to vector<16x1xf32>
    %40 = arith.divf %38, %39 : vector<16x1xf32>
    %41 = vector.broadcast %33 : vector<16x1xf32> to vector<16x32xf32>
    %42 = arith.subf %1, %41 : vector<16x32xf32>
    %cst_16 = arith.constant 9.99999974E-6 : f32
    %43 = vector.broadcast %cst_16 : f32 to vector<16x1xf32>
    %44 = arith.addf %40, %43 : vector<16x1xf32>
    %45 = math.rsqrt %44 : vector<16x1xf32>
    %46 = vector.broadcast %45 : vector<16x1xf32> to vector<16x32xf32>
    %47 = arith.mulf %42, %46 : vector<16x32xf32>
    %48 = vector.broadcast %18 : vector<1x32xf32> to vector<16x32xf32>
    %49 = arith.mulf %47, %48 : vector<16x32xf32>
    %50 = vector.broadcast %19 : vector<1x32xf32> to vector<16x32xf32>
    %51 = arith.addf %49, %50 : vector<16x32xf32>
    %52 = arith.truncf %51 : vector<16x32xf32> to vector<16x32xbf16>
    %cst_17 = arith.constant dense<0.000000e+00> : vector<16x96xf32>
    %53 = tpu.matmul %52, %7, %cst_17 {dimension_numbers = #tpu.dot_dimension_numbers<[1], [0], [0], [1], [0, 0, 1, 1], [], []>} : vector<16x32xbf16>, vector<32x96xbf16>, vector<16x96xf32> -> vector<16x96xf32>
    %54 = vector.broadcast %20 : vector<1x96xf32> to vector<16x96xf32>
    %55 = arith.addf %53, %54 : vector<16x96xf32>
    %56 = vector.shape_cast %55 : vector<16x96xf32> to vector<2x8x96xf32>
    %57 = vector.extract_strided_slice %56 {offsets = [0, 0, 0], sizes = [2, 8, 8], strides = [1, 1, 1]} : vector<2x8x96xf32> to vector<2x8x8xf32>
    %58 = vector.extract_strided_slice %56 {offsets = [0, 0, 8], sizes = [2, 8, 8], strides = [1, 1, 1]} : vector<2x8x96xf32> to vector<2x8x8xf32>
    %59 = vector.extract_strided_slice %56 {offsets = [0, 0, 16], sizes = [2, 8, 8], strides = [1, 1, 1]} : vector<2x8x96xf32> to vector<2x8x8xf32>
    %60 = vector.extract_strided_slice %56 {offsets = [0, 0, 24], sizes = [2, 8, 8], strides = [1, 1, 1]} : vector<2x8x96xf32> to vector<2x8x8xf32>
    %61 = tpu.concatenate %57, %58, %59, %60 in 0 : vector<2x8x8xf32>, vector<2x8x8xf32>, vector<2x8x8xf32>, vector<2x8x8xf32> -> vector<8x8x8xf32>
    %62 = arith.truncf %61 : vector<8x8x8xf32> to vector<8x8x8xbf16>
    %63 = vector.extract_strided_slice %56 {offsets = [0, 0, 32], sizes = [2, 8, 8], strides = [1, 1, 1]} : vector<2x8x96xf32> to vector<2x8x8xf32>
    %64 = vector.extract_strided_slice %56 {offsets = [0, 0, 40], sizes = [2, 8, 8], strides = [1, 1, 1]} : vector<2x8x96xf32> to vector<2x8x8xf32>
    %65 = vector.extract_strided_slice %56 {offsets = [0, 0, 48], sizes = [2, 8, 8], strides = [1, 1, 1]} : vector<2x8x96xf32> to vector<2x8x8xf32>
    %66 = vector.extract_strided_slice %56 {offsets = [0, 0, 56], sizes = [2, 8, 8], strides = [1, 1, 1]} : vector<2x8x96xf32> to vector<2x8x8xf32>
    %67 = tpu.concatenate %63, %64, %65, %66 in 0 : vector<2x8x8xf32>, vector<2x8x8xf32>, vector<2x8x8xf32>, vector<2x8x8xf32> -> vector<8x8x8xf32>
    %68 = arith.truncf %67 : vector<8x8x8xf32> to vector<8x8x8xbf16>
    %69 = vector.extract_strided_slice %56 {offsets = [0, 0, 64], sizes = [2, 8, 8], strides = [1, 1, 1]} : vector<2x8x96xf32> to vector<2x8x8xf32>
    %70 = vector.extract_strided_slice %56 {offsets = [0, 0, 72], sizes = [2, 8, 8], strides = [1, 1, 1]} : vector<2x8x96xf32> to vector<2x8x8xf32>
    %71 = vector.extract_strided_slice %56 {offsets = [0, 0, 80], sizes = [2, 8, 8], strides = [1, 1, 1]} : vector<2x8x96xf32> to vector<2x8x8xf32>
    %72 = vector.extract_strided_slice %56 {offsets = [0, 0, 88], sizes = [2, 8, 8], strides = [1, 1, 1]} : vector<2x8x96xf32> to vector<2x8x8xf32>
    %73 = tpu.concatenate %69, %70, %71, %72 in 0 : vector<2x8x8xf32>, vector<2x8x8xf32>, vector<2x8x8xf32>, vector<2x8x8xf32> -> vector<8x8x8xf32>
    %74 = arith.truncf %73 : vector<8x8x8xf32> to vector<8x8x8xbf16>
    "tpu.trace_start"() <{level = 10 : i32, message = "bqd,bkd->bqk"}> : () -> ()
    %cst_18 = arith.constant dense<0.000000e+00> : vector<8x8x8xf32>
    %75 = tpu.matmul %62, %68, %cst_18 {dimension_numbers = #tpu.dot_dimension_numbers<[2], [2], [1], [1], [0, 0, 0, 1, 1, 1], [0], [0]>} : vector<8x8x8xbf16>, vector<8x8x8xbf16>, vector<8x8x8xf32> -> vector<8x8x8xf32>
    "tpu.trace_stop"() : () -> ()
    %cst_19 = arith.constant 0.353553385 : f32
    %76 = vector.broadcast %cst_19 : f32 to vector<8x8x8xf32>
    %77 = arith.mulf %75, %76 : vector<8x8x8xf32>
    %78 = tpu.concatenate %2, %2, %2, %2 in 0 : vector<2x8x8xf32>, vector<2x8x8xf32>, vector<2x8x8xf32>, vector<2x8x8xf32> -> vector<8x8x8xf32>
    %79 = arith.addf %77, %78 : vector<8x8x8xf32>
    %cst_20 = arith.constant dense<0xFF800000> : vector<8x8xf32>
    %80 = vector.multi_reduction <maximumf>, %79, %cst_20 [2] : vector<8x8x8xf32> to vector<8x8xf32>
    %81 = vector.shape_cast %80 : vector<8x8xf32> to vector<8x8x1xf32>
    %82 = vector.broadcast %81 : vector<8x8x1xf32> to vector<8x8x8xf32>
    %83 = arith.subf %79, %82 : vector<8x8x8xf32>
    %84 = math.exp %83 : vector<8x8x8xf32>
    %cst_21 = arith.constant dense<0.000000e+00> : vector<8x8xf32>
    %85 = vector.multi_reduction <add>, %84, %cst_21 [2] : vector<8x8x8xf32> to vector<8x8xf32>
    %86 = vector.shape_cast %85 : vector<8x8xf32> to vector<8x8x1xf32>
    %87 = tpu.reciprocal %86 {approx = true} : vector<8x8x1xf32> -> vector<8x8x1xf32>
    %88 = vector.broadcast %87 : vector<8x8x1xf32> to vector<8x8x8xf32>
    %89 = arith.mulf %84, %88 : vector<8x8x8xf32>
    %90 = arith.truncf %89 : vector<8x8x8xf32> to vector<8x8x8xbf16>
    "tpu.trace_start"() <{level = 10 : i32, message = "bqk,bkd->bqd"}> : () -> ()
    %cst_22 = arith.constant dense<0.000000e+00> : vector<8x8x8xf32>
    %91 = tpu.matmul %90, %74, %cst_22 {dimension_numbers = #tpu.dot_dimension_numbers<[2], [1], [1], [2], [0, 0, 0, 1, 1, 2], [0], [0]>} : vector<8x8x8xbf16>, vector<8x8x8xbf16>, vector<8x8x8xf32> -> vector<8x8x8xf32>
    "tpu.trace_stop"() : () -> ()
    %92 = vector.extract_strided_slice %91 {offsets = [0, 0, 0], sizes = [2, 8, 8], strides = [1, 1, 1]} : vector<8x8x8xf32> to vector<2x8x8xf32>
    %93 = vector.extract_strided_slice %91 {offsets = [2, 0, 0], sizes = [2, 8, 8], strides = [1, 1, 1]} : vector<8x8x8xf32> to vector<2x8x8xf32>
    %94 = vector.extract_strided_slice %91 {offsets = [4, 0, 0], sizes = [2, 8, 8], strides = [1, 1, 1]} : vector<8x8x8xf32> to vector<2x8x8xf32>
    %95 = vector.extract_strided_slice %91 {offsets = [6, 0, 0], sizes = [2, 8, 8], strides = [1, 1, 1]} : vector<8x8x8xf32> to vector<2x8x8xf32>
    %96 = tpu.concatenate %92, %93, %94, %95 in 2 : vector<2x8x8xf32>, vector<2x8x8xf32>, vector<2x8x8xf32>, vector<2x8x8xf32> -> vector<2x8x32xf32>
    %97 = vector.shape_cast %96 : vector<2x8x32xf32> to vector<16x32xf32>
    %98 = arith.truncf %97 : vector<16x32xf32> to vector<16x32xbf16>
    %cst_23 = arith.constant dense<0.000000e+00> : vector<16x32xf32>
    %99 = tpu.matmul %98, %9, %cst_23 {dimension_numbers = #tpu.dot_dimension_numbers<[1], [0], [0], [1], [0, 0, 1, 1], [], []>} : vector<16x32xbf16>, vector<32x32xbf16>, vector<16x32xf32> -> vector<16x32xf32>
    %100 = vector.broadcast %21 : vector<1x32xf32> to vector<16x32xf32>
    %101 = arith.addf %99, %100 : vector<16x32xf32>
    %102 = arith.addf %1, %101 : vector<16x32xf32>
    %cst_24 = arith.constant dense<0.000000e+00> : vector<16xf32>
    %103 = vector.multi_reduction <add>, %102, %cst_24 [1] : vector<16x32xf32> to vector<16xf32>
    %104 = vector.shape_cast %103 : vector<16xf32> to vector<16x1xf32>
    %cst_25 = arith.constant 3.200000e+01 : f32
    %105 = vector.broadcast %cst_25 : f32 to vector<16x1xf32>
    %106 = arith.divf %104, %105 : vector<16x1xf32>
    %107 = vector.broadcast %106 : vector<16x1xf32> to vector<16x32xf32>
    %108 = arith.subf %102, %107 : vector<16x32xf32>
    %109 = arith.mulf %108, %108 : vector<16x32xf32>
    %cst_26 = arith.constant dense<0.000000e+00> : vector<16xf32>
    %110 = vector.multi_reduction <add>, %109, %cst_26 [1] : vector<16x32xf32> to vector<16xf32>
    %111 = vector.shape_cast %110 : vector<16xf32> to vector<16x1xf32>
    %cst_27 = arith.constant 3.200000e+01 : f32
    %112 = vector.broadcast %cst_27 : f32 to vector<16x1xf32>
    %113 = arith.divf %111, %112 : vector<16x1xf32>
    %114 = vector.broadcast %106 : vector<16x1xf32> to vector<16x32xf32>
    %115 = arith.subf %102, %114 : vector<16x32xf32>
    %cst_28 = arith.constant 9.99999974E-6 : f32
    %116 = vector.broadcast %cst_28 : f32 to vector<16x1xf32>
    %117 = arith.addf %113, %116 : vector<16x1xf32>
    %118 = math.rsqrt %117 : vector<16x1xf32>
    %119 = vector.broadcast %118 : vector<16x1xf32> to vector<16x32xf32>
    %120 = arith.mulf %115, %119 : vector<16x32xf32>
    %121 = vector.broadcast %22 : vector<1x32xf32> to vector<16x32xf32>
    %122 = arith.mulf %120, %121 : vector<16x32xf32>
    %123 = vector.broadcast %23 : vector<1x32xf32> to vector<16x32xf32>
    %124 = arith.addf %122, %123 : vector<16x32xf32>
    %125 = arith.truncf %124 : vector<16x32xf32> to vector<16x32xbf16>
    %cst_29 = arith.constant dense<0.000000e+00> : vector<16x128xf32>
    %126 = tpu.matmul %125, %11, %cst_29 {dimension_numbers = #tpu.dot_dimension_numbers<[1], [0], [0], [1], [0, 0, 1, 1], [], []>} : vector<16x32xbf16>, vector<32x128xbf16>, vector<16x128xf32> -> vector<16x128xf32>
    %127 = vector.broadcast %24 : vector<1x128xf32> to vector<16x128xf32>
    %128 = arith.addf %126, %127 : vector<16x128xf32>
    %cst_30 = arith.constant 5.000000e-01 : f32
    %129 = vector.broadcast %cst_30 : f32 to vector<16x128xf32>
    %130 = arith.mulf %129, %128 : vector<16x128xf32>
    %cst_31 = arith.constant 0.707106769 : f32
    %131 = vector.broadcast %cst_31 : f32 to vector<16x128xf32>
    %132 = arith.mulf %128, %131 : vector<16x128xf32>
    %133 = math.erf %132 : vector<16x128xf32>
    %cst_32 = arith.constant 1.000000e+00 : f32
    %134 = vector.broadcast %cst_32 : f32 to vector<16x128xf32>
    %135 = arith.addf %134, %133 : vector<16x128xf32>
    %136 = arith.mulf %130, %135 : vector<16x128xf32>
    %137 = arith.truncf %136 : vector<16x128xf32> to vector<16x128xbf16>
    %cst_33 = arith.constant dense<0.000000e+00> : vector<16x32xf32>
    %138 = tpu.matmul %137, %15, %cst_33 {dimension_numbers = #tpu.dot_dimension_numbers<[1], [0], [0], [1], [0, 0, 1, 1], [], []>} : vector<16x128xbf16>, vector<128x32xbf16>, vector<16x32xf32> -> vector<16x32xf32>
    %139 = arith.addf %102, %138 : vector<16x32xf32>
    %140 = vector.broadcast %25 : vector<1x32xf32> to vector<16x32xf32>
    %141 = arith.addf %139, %140 : vector<16x32xf32>
    %cst_34 = arith.constant dense<0.000000e+00> : vector<16xf32>
    %142 = vector.multi_reduction <add>, %141, %cst_34 [1] : vector<16x32xf32> to vector<16xf32>
    %143 = vector.shape_cast %142 : vector<16xf32> to vector<16x1xf32>
    %cst_35 = arith.constant 3.200000e+01 : f32
    %144 = vector.broadcast %cst_35 : f32 to vector<16x1xf32>
    %145 = arith.divf %143, %144 : vector<16x1xf32>
    %146 = vector.broadcast %145 : vector<16x1xf32> to vector<16x32xf32>
    %147 = arith.subf %141, %146 : vector<16x32xf32>
    %148 = arith.mulf %147, %147 : vector<16x32xf32>
    %cst_36 = arith.constant dense<0.000000e+00> : vector<16xf32>
    %149 = vector.multi_reduction <add>, %148, %cst_36 [1] : vector<16x32xf32> to vector<16xf32>
    %150 = vector.shape_cast %149 : vector<16xf32> to vector<16x1xf32>
    %cst_37 = arith.constant 3.200000e+01 : f32
    %151 = vector.broadcast %cst_37 : f32 to vector<16x1xf32>
    %152 = arith.divf %150, %151 : vector<16x1xf32>
    %153 = vector.broadcast %145 : vector<16x1xf32> to vector<16x32xf32>
    %154 = arith.subf %141, %153 : vector<16x32xf32>
    %cst_38 = arith.constant 9.99999974E-6 : f32
    %155 = vector.broadcast %cst_38 : f32 to vector<16x1xf32>
    %156 = arith.addf %152, %155 : vector<16x1xf32>
    %157 = math.rsqrt %156 : vector<16x1xf32>
    %158 = vector.broadcast %157 : vector<16x1xf32> to vector<16x32xf32>
    %159 = arith.mulf %154, %158 : vector<16x32xf32>
    %160 = vector.broadcast %26 : vector<1x32xf32> to vector<16x32xf32>
    %161 = arith.mulf %159, %160 : vector<16x32xf32>
    %162 = vector.broadcast %27 : vector<1x32xf32> to vector<16x32xf32>
    %163 = arith.addf %161, %162 : vector<16x32xf32>
    %164 = arith.truncf %163 : vector<16x32xf32> to vector<16x32xbf16>
    %cst_39 = arith.constant dense<0.000000e+00> : vector<16x16xf32>
    %165 = tpu.matmul %164, %13, %cst_39 {dimension_numbers = #tpu.dot_dimension_numbers<[1], [0], [0], [1], [0, 0, 1, 1], [], []>} : vector<16x32xbf16>, vector<32x16xbf16>, vector<16x16xf32> -> vector<16x16xf32>
    %166 = vector.broadcast %28 : vector<1x16xf32> to vector<16x16xf32>
    %167 = arith.addf %165, %166 : vector<16x16xf32>
    %cst_40 = arith.constant 0.000000e+00 : f32
    %168 = vector.broadcast %cst_40 : f32 to vector<16x16xf32>
    %169 = arith.maximumf %167, %168 : vector<16x16xf32>
    %170 = arith.truncf %169 : vector<16x16xf32> to vector<16x16xbf16>
    %cst_41 = arith.constant dense<0.000000e+00> : vector<16x32xf32>
    %171 = tpu.matmul %170, %17, %cst_41 {dimension_numbers = #tpu.dot_dimension_numbers<[1], [0], [0], [1], [0, 0, 1, 1], [], []>} : vector<16x16xbf16>, vector<16x32xbf16>, vector<16x32xf32> -> vector<16x32xf32>
    %172 = arith.addf %141, %171 : vector<16x32xf32>
    %173 = vector.broadcast %29 : vector<1x32xf32> to vector<16x32xf32>
    %174 = arith.addf %172, %173 : vector<16x32xf32>
    %175 = vector.shape_cast %174 : vector<16x32xf32> to vector<2x8x32xf32>
    %c0_42 = arith.constant 0 : index
    %c0_43 = arith.constant 0 : index
    %c0_44 = arith.constant 0 : index
    %176 = vector.load %arg6[%c0_42, %c0_43, %c0_44] : memref<2x8x32xf32, #tpu.memory_space<vmem>>, vector<2x8x32xf32>
    tpu.vector_store %arg6[%c0_42, %c0_43, %c0_44], %175 {strides = array<i32>} : memref<2x8x32xf32, #tpu.memory_space<vmem>>, vector<2x8x32xf32>,
    return
  }
  func.func @transform_0(%arg0: i32) -> (i32, i32, i32) {
    %c0_i32 = arith.constant 0 : i32
    %c0_i32_0 = arith.constant 0 : i32
    %c0_i32_1 = arith.constant 0 : i32
    return %arg0, %c0_i32, %c0_i32_0 : i32, i32, i32
  }
  func.func @transform_1(%arg0: i32) -> (i32, i32, i32) {
    %c0_i32 = arith.constant 0 : i32
    %c0_i32_0 = arith.constant 0 : i32
    %c0_i32_1 = arith.constant 0 : i32
    return %arg0, %c0_i32, %c0_i32_0 : i32, i32, i32
  }
  func.func @transform_2(%arg0: i32) -> (i32, i32, i32) {
    %c0_i32 = arith.constant 0 : i32
    %c0_i32_0 = arith.constant 0 : i32
    %c0_i32_1 = arith.constant 0 : i32
    %c0_i32_2 = arith.constant 0 : i32
    return %c0_i32, %c0_i32_0, %c0_i32_1 : i32, i32, i32
  }
  func.func @transform_3(%arg0: i32) -> (i32, i32, i32) {
    %c0_i32 = arith.constant 0 : i32
    %c0_i32_0 = arith.constant 0 : i32
    %c0_i32_1 = arith.constant 0 : i32
    %c0_i32_2 = arith.constant 0 : i32
    return %c0_i32, %c0_i32_0, %c0_i32_1 : i32, i32, i32
  }
  func.func @transform_4(%arg0: i32) -> (i32, i32) {
    %c0_i32 = arith.constant 0 : i32
    %c0_i32_0 = arith.constant 0 : i32
    %c0_i32_1 = arith.constant 0 : i32
    return %c0_i32, %c0_i32_0 : i32, i32
  }
  func.func @transform_5(%arg0: i32) -> (i32, i32, i32) {
    %c0_i32 = arith.constant 0 : i32
    %c0_i32_0 = arith.constant 0 : i32
    %c0_i32_1 = arith.constant 0 : i32
    return %arg0, %c0_i32, %c0_i32_0 : i32, i32, i32
  }
}

</mosaic_0001>

<llo_original>
// kernel: tpu_custom_call.1
$region0: #{tpu_custom_call.1}
  #allocation0 [shape = 'u32[]', space=smem, size = 0x4, offset = 0x4, fixed_abs, tag = 'smem constant byte address 0x4 - core index']
  #allocation1 [shape = 'u32[144,128]{1,0:T(1,128)}', space=vmem, size = 0x12000, scoped, tag = 'internal scratch']
  %s0 = inlined_call_operand.vmem [shape: f32[4,8,32], index: 0, kind: input, shape index: {}]
  %s1 = inlined_call_operand.vmem [shape: f32[4,8,8], index: 1, kind: input, shape index: {}]
  %s2 = inlined_call_operand.vmem [shape: bf16[4,32,128], index: 2, kind: input, shape index: {}]
  %s3 = inlined_call_operand.vmem [shape: bf16[2,128,32], index: 3, kind: input, shape index: {}]
  %s4 = inlined_call_operand.vmem [shape: f32[12,128], index: 4, kind: input, shape index: {}]
  %s5 = inlined_call_operand.hbm [shape: f32[4,8,32], index: 5, kind: output, shape index: {}]
  %s6 = sld [smem:[#allocation0]]
  $region53: #{tpu_custom_call.1} parent=0
    _
  %s8 = ssub.s32 1, %s6
  %s9 = scalar_select 0, %s8, %s6
  $region1: #{tpu_custom_call.1} parent=0
    #allocation2 [shape = 'u8[16384]{0}', space=vmem, size = 0x4000, scoped, tag = 'output window, operand 0']
    #allocation3 [shape = 's32[2]{0}', space=sflag, size = 0x8, scoped, tag = 'scoped memory for tpu_custom_call.1']
    %10 = vsyncpa [#allocation3], 0
    %s11 = scalar_lea.sflag [#allocation3], 1
    %12 = vsyncpa %s11, 0
    loop: start=0, step=1, limit=4
    $region2: #{tpu_custom_call.1} parent=1 // loop_pre_header
      _
    $region3: #{tpu_custom_call.1} parent=1 // loop_header
      %s14 = sphi 0, %s18
      %p15 = scmp.ge.s32.totalorder %s14, 4
      %s24 = sphi 0, %s26
      %s27 = sphi 0, %s24
      %s28 = sphi 0, %s27
      %s44 = sphi 0, %s28
      %s50 = sphi 0, %s52
      %s53 = sphi 0, %s50
      %s54 = sphi 0, %s53
      %s70 = sphi 0, %s54
      %s74 = sphi 0, %s74
      %s76 = sphi 0, %s74
      %s77 = sphi 0, %s76
      %s91 = sphi 0, %s77
      %s95 = sphi 0, %s95
      %s97 = sphi 0, %s95
      %s98 = sphi 0, %s97
      %s112 = sphi 0, %s98
      %s116 = sphi 0, %s116
      %s118 = sphi 0, %s116
      %s119 = sphi 0, %s118
      %s133 = sphi 0, %s119
      %s139 = sphi 0, %s141
      %s142 = sphi 0, %s139
      %s143 = sphi 0, %s142
      %s159 = sphi 0, %s143
    $region4: #{tpu_custom_call.1} parent=1 // loop_header_branch
      %17 = sbr.rel (%p15) target = $region8
    $region5: #{tpu_custom_call.1} parent=1 // loop_body
      %s19 = ssub.s32 %s14, 1
      %s20 = ssub.s32 %s14, 2
      %s21 = sadd.s32 %s14, 1
      %s22 = ssub.s32 %s14, %s21
      %p23 = scmp.eq.s32.totalorder %s22, 0
      %s25 = sadd.s32 %s24, 1
      %s26 = scalar_select %p23, %s24, %s25
      %p29 = pneg %p23
      %p30 = scmp.eq.s32.totalorder %s14, 1
      %p31 = por %p29, %p30
      %p32 = scmp.ne.s32.totalorder %s24, %s27
      %p33 = scmp.eq.s32.totalorder %s14, 0
      %p34 = por %p32, %p33
      %p35 = scmp.ne.s32.totalorder %s24, %s27
      %p36 = scmp.eq.s32.totalorder %s19, 1
      %p37 = por %p35, %p36
      %p38 = scmp.ne.s32.totalorder %s27, %s28
      %p39 = scmp.eq.s32.totalorder %s19, 0
      %p40 = por %p38, %p39
      %p41 = scmp.ne.s32.totalorder %s27, %s28
      %p42 = scmp.eq.s32.totalorder %s20, 1
      %p43 = por %p41, %p42
      %p45 = scmp.ne.s32.totalorder %s28, %s44
      %p46 = scmp.eq.s32.totalorder %s20, 0
      %p47 = por %p45, %p46
      %s48 = ssub.s32 %s14, %s21
      %p49 = scmp.eq.s32.totalorder %s48, 0
      %s51 = sadd.s32 %s50, 1
      %s52 = scalar_select %p49, %s50, %s51
      %p55 = pneg %p49
      %p56 = scmp.eq.s32.totalorder %s14, 1
      %p57 = por %p55, %p56
      %p58 = scmp.ne.s32.totalorder %s50, %s53
      %p59 = scmp.eq.s32.totalorder %s14, 0
      %p60 = por %p58, %p59
      %p61 = scmp.ne.s32.totalorder %s50, %s53
      %p62 = scmp.eq.s32.totalorder %s19, 1
      %p63 = por %p61, %p62
      %p64 = scmp.ne.s32.totalorder %s53, %s54
      %p65 = scmp.eq.s32.totalorder %s19, 0
      %p66 = por %p64, %p65
      %p67 = scmp.ne.s32.totalorder %s53, %s54
      %p68 = scmp.eq.s32.totalorder %s20, 1
      %p69 = por %p67, %p68
      %p71 = scmp.ne.s32.totalorder %s54, %s70
      %p72 = scmp.eq.s32.totalorder %s20, 0
      %p73 = por %p71, %p72
      %s75 = sadd.s32 %s74, 1
      %p78 = scmp.eq.s32.totalorder %s14, 1
      %p79 = scmp.ne.s32.totalorder %s74, %s76
      %p80 = scmp.eq.s32.totalorder %s14, 0
      %p81 = por %p79, %p80
      %p82 = scmp.ne.s32.totalorder %s74, %s76
      %p83 = scmp.eq.s32.totalorder %s19, 1
      %p84 = por %p82, %p83
      %p85 = scmp.ne.s32.totalorder %s76, %s77
      %p86 = scmp.eq.s32.totalorder %s19, 0
      %p87 = por %p85, %p86
      %p88 = scmp.ne.s32.totalorder %s76, %s77
      %p89 = scmp.eq.s32.totalorder %s20, 1
      %p90 = por %p88, %p89
      %p92 = scmp.ne.s32.totalorder %s77, %s91
      %p93 = scmp.eq.s32.totalorder %s20, 0
      %p94 = por %p92, %p93
      %s96 = sadd.s32 %s95, 1
      %p99 = scmp.eq.s32.totalorder %s14, 1
      %p100 = scmp.ne.s32.totalorder %s95, %s97
      %p101 = scmp.eq.s32.totalorder %s14, 0
      %p102 = por %p100, %p101
      %p103 = scmp.ne.s32.totalorder %s95, %s97
      %p104 = scmp.eq.s32.totalorder %s19, 1
      %p105 = por %p103, %p104
      %p106 = scmp.ne.s32.totalorder %s97, %s98
      %p107 = scmp.eq.s32.totalorder %s19, 0
      %p108 = por %p106, %p107
      %p109 = scmp.ne.s32.totalorder %s97, %s98
      %p110 = scmp.eq.s32.totalorder %s20, 1
      %p111 = por %p109, %p110
      %p113 = scmp.ne.s32.totalorder %s98, %s112
      %p114 = scmp.eq.s32.totalorder %s20, 0
      %p115 = por %p113, %p114
      %s117 = sadd.s32 %s116, 1
      %p120 = scmp.eq.s32.totalorder %s14, 1
      %p121 = scmp.ne.s32.totalorder %s116, %s118
      %p122 = scmp.eq.s32.totalorder %s14, 0
      %p123 = por %p121, %p122
      %p124 = scmp.ne.s32.totalorder %s116, %s118
      %p125 = scmp.eq.s32.totalorder %s19, 1
      %p126 = por %p124, %p125
      %p127 = scmp.ne.s32.totalorder %s118, %s119
      %p128 = scmp.eq.s32.totalorder %s19, 0
      %p129 = por %p127, %p128
      %p130 = scmp.ne.s32.totalorder %s118, %s119
      %p131 = scmp.eq.s32.totalorder %s20, 1
      %p132 = por %p130, %p131
      %p134 = scmp.ne.s32.totalorder %s119, %s133
      %p135 = scmp.eq.s32.totalorder %s20, 0
      %p136 = por %p134, %p135
      %s137 = ssub.s32 %s14, %s21
      %p138 = scmp.eq.s32.totalorder %s137, 0
      %s140 = sadd.s32 %s139, 1
      %s141 = scalar_select %p138, %s139, %s140
      %p144 = pneg %p138
      %p145 = scmp.eq.s32.totalorder %s14, 1
      %p146 = por %p144, %p145
      %p147 = scmp.ne.s32.totalorder %s139, %s142
      %p148 = scmp.eq.s32.totalorder %s14, 0
      %p149 = por %p147, %p148
      %p150 = scmp.ne.s32.totalorder %s139, %s142
      %p151 = scmp.eq.s32.totalorder %s19, 1
      %p152 = por %p150, %p151
      %p153 = scmp.ne.s32.totalorder %s142, %s143
      %p154 = scmp.eq.s32.totalorder %s19, 0
      %p155 = por %p153, %p154
      %p156 = scmp.ne.s32.totalorder %s142, %s143
      %p157 = scmp.eq.s32.totalorder %s20, 1
      %p158 = por %p156, %p157
      %p160 = scmp.ne.s32.totalorder %s143, %s159
      %p161 = scmp.eq.s32.totalorder %s20, 0
      %p162 = por %p160, %p161
      %p163 = scmp.le.s32.totalorder 1, %s14
      %p164 = scmp.lt.s32.totalorder %s14, 3
      %p165 = pnand %p163, %p164
      %p166 = pneg %p165
      // Predicated region
      $region9: #{tpu_custom_call.1} parent=5 // pred_check
        _
      $region10: #{tpu_custom_call.1} parent=5 // pred_check_branch
        %168 = sbr.rel (%p165) target = $region12
      $region11: #{tpu_custom_call.1} parent=5 // pred_region
        %s169 = ssub.s32 %s14, 1
        // Predicated region
        $region13: #{tpu_custom_call.1} parent=11 // pred_check
          %p170 = pneg %p87
        $region14: #{tpu_custom_call.1} parent=11 // pred_check_branch
          %172 = sbr.rel (%p170) target = $region16
        $region15: #{tpu_custom_call.1} parent=11 // pred_region
          _
        $region16: #{tpu_custom_call.1} parent=11 // pred_fallthru
          _
        // Predicated region
        $region17: #{tpu_custom_call.1} parent=11 // pred_check
          %p173 = pneg %p108
        $region18: #{tpu_custom_call.1} parent=11 // pred_check_branch
          %175 = sbr.rel (%p173) target = $region20
        $region19: #{tpu_custom_call.1} parent=11 // pred_region
          _
        $region20: #{tpu_custom_call.1} parent=11 // pred_fallthru
          _
        // Predicated region
        $region21: #{tpu_custom_call.1} parent=11 // pred_check
          %p176 = pneg %p129
        $region22: #{tpu_custom_call.1} parent=11 // pred_check_branch
          %178 = sbr.rel (%p176) target = $region24
        $region23: #{tpu_custom_call.1} parent=11 // pred_region
          _
        $region24: #{tpu_custom_call.1} parent=11 // pred_fallthru
          _
      $region12: #{tpu_custom_call.1} parent=5 // pred_fallthru
        _
      %p179 = scmp.lt.s32.totalorder %s14, 2
      // Predicated region
      $region25: #{tpu_custom_call.1} parent=5 // pred_check
        %p180 = pneg %p179
      $region26: #{tpu_custom_call.1} parent=5 // pred_check_branch
        %182 = sbr.rel (%p180) target = $region28
      $region27: #{tpu_custom_call.1} parent=5 // pred_region
        // Predicated region
        $region29: #{tpu_custom_call.1} parent=27 // pred_check
          %p183 = pneg %p34
        $region30: #{tpu_custom_call.1} parent=27 // pred_check_branch
          %185 = sbr.rel (%p183) target = $region32
        $region31: #{tpu_custom_call.1} parent=27 // pred_region
          %s186 = smul.u32 2, %s14
          %p187 = scmp.lt.s32.totalorder %s186, 3
          %s188 = scalar_select %p187, %s186, 3
          %s189 = smul.addr %s188, 8
          %s190 = scalar_lea.vmem %s0, %s189
          %s191 = smul.u32 2, %s14
        $region32: #{tpu_custom_call.1} parent=27 // pred_fallthru
          _
        // Predicated region
        $region33: #{tpu_custom_call.1} parent=27 // pred_check
          %p192 = pneg %p60
        $region34: #{tpu_custom_call.1} parent=27 // pred_check_branch
          %194 = sbr.rel (%p192) target = $region36
        $region35: #{tpu_custom_call.1} parent=27 // pred_region
          %s195 = smul.u32 2, %s14
          %p196 = scmp.lt.s32.totalorder %s195, 3
          %s197 = scalar_select %p196, %s195, 3
          %s198 = smul.addr %s197, 8
          %s199 = scalar_lea.vmem %s1, %s198
          %s200 = smul.u32 2, %s14
        $region36: #{tpu_custom_call.1} parent=27 // pred_fallthru
          _
      $region28: #{tpu_custom_call.1} parent=5 // pred_fallthru
        _
      %p201 = scmp.le.s32.totalorder 1, %s14
      %p202 = scmp.lt.s32.totalorder %s14, 3
      %p203 = pnand %p201, %p202
      %p204 = pneg %p203
      // Predicated region
      $region37: #{tpu_custom_call.1} parent=5 // pred_check
        _
      $region38: #{tpu_custom_call.1} parent=5 // pred_check_branch
        %206 = sbr.rel (%p203) target = $region40
      $region39: #{tpu_custom_call.1} parent=5 // pred_region
        %s207 = ssub.s32 %s14, 1
        %s208 = smul.u32 2, %s19
        %p209 = scmp.lt.s32.totalorder %s208, 3
        %s210 = scalar_select %p209, %s208, 3
        %s211 = smul.addr %s210, 8
        %s212 = scalar_lea.vmem %s0, %s211
        %p213 = pneg %p40
        %p214 = pneg %p37
        %s215 = smul.u32 2, %s19
        %p216 = scmp.lt.s32.totalorder %s215, 3
        %s217 = scalar_select %p216, %s215, 3
        %s218 = smul.addr %s217, 8
        %s219 = scalar_lea.vmem %s1, %s218
        %p220 = pneg %p66
        %p221 = pneg %p63
        %p222 = pneg %p87
        %p223 = pneg %p84
        %p224 = pneg %p108
        %p225 = pneg %p105
        %p226 = pneg %p129
        %p227 = pneg %p126
        %p228 = pneg %p155
        %p229 = pneg %p152
        %s230 = sand.u32 %s142, 1
        %s231 = scalar_lea.sflag [#allocation3], %s230
        %s232 = sand.u32 %s142, 1
        %s233 = smul.addr %s232, 16
        %s234 = scalar_lea.vmem [#allocation2], %s233
        %s235 = smul.u32 2, %s19
        %p236 = scmp.lt.s32.totalorder %s235, 3
        %s237 = scalar_select %p236, %s235, 3
        %s238 = smul.addr %s237, 8
        %s239 = scalar_lea.vmem %s0, %s238
        %s240 = smul.u32 2, %s19
        %s241 = smul.u32 2, %s19
        %p242 = scmp.lt.s32.totalorder %s241, 3
        %s243 = scalar_select %p242, %s241, 3
        %s244 = smul.addr %s243, 8
        %s245 = scalar_lea.vmem %s1, %s244
        %s246 = smul.u32 2, %s19
        %s247 = smul.u32 2, %s19
        %v249 = vld [vmem:[%s239] sm:$0xff]
        %v250 = vld [vmem:[%s239 + $0x8] sm:$0xff]
        %v251 = vld [vmem:[%s245] sm:$0xff]
        %v252 = vld [vmem:[%s245 + $0x8] sm:$0xff]
        %v253 = vld [vmem:[%s2] sm:$0xf]
        %v254 = vld [vmem:[%s2 + $0x4] sm:$0xf]
        %v255 = vld [vmem:[%s2 + $0x8] sm:$0xf]
        %v256 = vld [vmem:[%s2 + $0xc] sm:$0xf]
        %v257 = vld [vmem:[%s2 + $0x10] sm:$0xf]
        %v258 = vld [vmem:[%s2 + $0x14] sm:$0xf]
        %v259 = vld [vmem:[%s2 + $0x18] sm:$0xf]
        %v260 = vld [vmem:[%s2 + $0x1c] sm:$0xf]
        %v261 = vld [vmem:[%s2 + $0x20] sm:$0xf]
        %v262 = vld [vmem:[%s2 + $0x24] sm:$0xf]
        %v263 = vld [vmem:[%s2 + $0x28] sm:$0xf]
        %v264 = vld [vmem:[%s2 + $0x2c] sm:$0xf]
        %v265 = vld [vmem:[%s2 + $0x30] sm:$0xf]
        %v266 = vld [vmem:[%s2 + $0x34] sm:$0xf]
        %v267 = vld [vmem:[%s2 + $0x38] sm:$0xf]
        %v268 = vld [vmem:[%s2 + $0x3c] sm:$0xf]
        %v269 = vld [vmem:[%s3] sm:$0xf]
        %v270 = vld [vmem:[%s3 + $0x4] sm:$0xf]
        %v271 = vld [vmem:[%s3 + $0x8] sm:$0xf]
        %v272 = vld [vmem:[%s3 + $0xc] sm:$0xf]
        %v273 = vld [vmem:[%s3 + $0x10] sm:$0xf]
        %v274 = vld [vmem:[%s3 + $0x14] sm:$0xf]
        %v275 = vld [vmem:[%s3 + $0x18] sm:$0xf]
        %v276 = vld [vmem:[%s3 + $0x1c] sm:$0xf]
        %v277 = vld [vmem:[%s3 + $0x20] sm:$0xf]
        %v278 = vld [vmem:[%s3 + $0x24] sm:$0xf]
        %v279 = vld [vmem:[%s3 + $0x28] sm:$0xf]
        %v280 = vld [vmem:[%s3 + $0x2c] sm:$0xf]
        %v281 = vld [vmem:[%s3 + $0x30] sm:$0xf]
        %v282 = vld [vmem:[%s3 + $0x34] sm:$0xf]
        %v283 = vld [vmem:[%s3 + $0x38] sm:$0xf]
        %v284 = vld [vmem:[%s3 + $0x3c] sm:$0xf]
        %v285 = vld [vmem:[%s3 + $0x40] sm:$0xf]
        %v286 = vld [vmem:[%s3 + $0x44] sm:$0xf]
        %v287 = vld [vmem:[%s4] sm:$0xff]
        %v288 = vld [vmem:[%s4 + $0x8] sm:$0xf]
        %vm289 = vcmask 261120
        %v290 = vsel %vm289, %v249, 0.0
        %291 = vadd.xlane.f32.xlu0 %v290
        %v292 = vpop.xlane.xlu0 %291
        %v293 = vsel %vm289, %v250, 0.0
        %294 = vadd.xlane.f32.xlu0 %v293
        %v295 = vpop.xlane.xlu0 %294
        %v296 = vrcp.pop 32.0
        %v297 = vmul.f32 %v292, %v296
        %v298 = vmul.f32 %v295, %v296
        %v299 = vsub.f32 %v249, %v297
        %v300 = vsub.f32 %v250, %v298
        %v301 = vmul.f32 %v299, %v299
        %v302 = vmul.f32 %v300, %v300
        %v303 = vsel %vm289, %v301, 0.0
        %304 = vadd.xlane.f32.xlu0 %v303
        %v305 = vpop.xlane.xlu0 %304
        %v306 = vsel %vm289, %v302, 0.0
        %307 = vadd.xlane.f32.xlu0 %v306
        %v308 = vpop.xlane.xlu0 %307
        %v309 = vmul.f32 %v305, %v296
        %v310 = vmul.f32 %v308, %v296
        %v311 = vadd.f32 %v309, 1e-05
        %v312 = vadd.f32 %v310, 1e-05
        %v313 = vrsqrt.pop %v311
        %v314 = vrsqrt.pop %v312
        %v315 = vmul.f32 %v299, %v313
        %v316 = vmul.f32 %v300, %v314
        %v317 = vlaneseq
        %v318 = vshrl.u32 %v317, 7
        %v319 = vsub.s32 0, %v318
        %v320 = vrot.slane %v287, %v319
        %v321 = vmul.f32 %v315, %v320
        %v322 = vmul.f32 %v316, %v320
        %v323 = vlaneseq
        %v324 = vshrl.u32 %v323, 7
        %v325 = vsub.s32 1, %v324
        %v326 = vrot.slane %v287, %v325
        %v327 = vadd.f32 %v321, %v326
        %v328 = vadd.f32 %v322, %v326
        %v329 = vpack.c.bf16 %v328, %v327
        %v330 = vlaneseq
        %v331 = vshrl.u32 %v330, 7
        %v332 = vsub.s32 2, %v331
        %v333 = vrot.slane %v287, %v332
        %v338 = vunpack.c.l.b16 %v253
        %v339 = vunpack.c.l.b16 %v254
        %v340 = vunpack.c.l.b16 %v255
        %v341 = vunpack.c.l.b16 %v256
        %v342 = vpack.c.b16 %v339, %v338
        %v343 = vpack.c.b16 %v341, %v340
        %v347 = vsel %vm289, %v329, 0
        %349 = vmatprep.subr.bf16.mxu0 0
        %350 = vmatpush1.bf16.msra.mxu0 %v342
        %351 = vmatprep.subr.bf16.mxu0 0
        %352 = vmatpush1.bf16.msra.mxu0 %v343
        %353 = vmatprep.subr.bf16.mxu0 0
        %354 = vmatpush1.bf16.msra.mxu0 0
        %355 = vmatprep.subr.bf16.mxu0 0
        %356 = vmatpush1.bf16.msra.mxu0 0
        %357 = vmatprep.subr.bf16.mxu0 0
        %358 = vmatpush1.bf16.msra.mxu0 0
        %359 = vmatprep.subr.bf16.mxu0 0
        %360 = vmatpush1.bf16.msra.mxu0 0
        %361 = vmatprep.subr.bf16.mxu0 0
        %362 = vmatpush1.bf16.msra.mxu0 0
        %363 = vmatprep.subr.bf16.mxu0 0
        %364 = vmatpush1.bf16.msra.mxu0 0
        %365 = vmatprep.subr.bf16.mxu0 0
        %366 = vmatpush1.bf16.msra.mxu0 0
        %367 = vmatprep.subr.bf16.mxu0 0
        %368 = vmatpush1.bf16.msra.mxu0 0
        %369 = vmatprep.subr.bf16.mxu0 0
        %370 = vmatpush1.bf16.msra.mxu0 0
        %371 = vmatprep.subr.bf16.mxu0 0
        %372 = vmatpush1.bf16.msra.mxu0 0
        %373 = vmatprep.subr.bf16.mxu0 0
        %374 = vmatpush1.bf16.msra.mxu0 0
        %375 = vmatprep.subr.bf16.mxu0 0
        %376 = vmatpush1.bf16.msra.mxu0 0
        %377 = vmatprep.subr.bf16.mxu0 0
        %378 = vmatpush1.bf16.msra.mxu0 0
        %379 = vmatprep.subr.bf16.mxu0 0
        %380 = vmatpush1.bf16.msra.mxu0 0
        %381 = vmatprep.mubr.bf16.mxu0 0
        %382 = vmatmul.mubr.bf16.gmra.mrb[0].mxu0 %v347
        %v383 = vpop.f32.mrb[0].mxu0
        %v384 = vadd.f32 %v333, %v383
        %v385 = vpop.f32.mrb[0].mxu0
        %v386 = vpop.f32.mrb[0].mxu0
        %v387 = vadd.f32 %v333, %v386
        %v388 = vpop.f32.mrb[0].mxu0
        %389 = vdwg.mxu0
        %392 = vrot.lane.b32.xlu0 %v384, 120
        %v393 = vpop.permute.xlu0 %392
        %394 = vrot.lane.b32.xlu0 %v387, 120
        %v395 = vpop.permute.xlu0 %394
        %398 = vrot.lane.b32.xlu0 %v384, 112
        %v399 = vpop.permute.xlu0 %398
        %400 = vrot.lane.b32.xlu0 %v387, 112
        %v401 = vpop.permute.xlu0 %400
        %404 = vrot.lane.b32.xlu0 %v384, 104
        %v405 = vpop.permute.xlu0 %404
        %406 = vrot.lane.b32.xlu0 %v387, 104
        %v407 = vpop.permute.xlu0 %406
        %v410 = vpack.c.bf16 %v384, %v384
        %v411 = vpack.c.bf16 %v387, %v387
        %v412 = vpack.c.bf16 %v393, %v393
        %v413 = vpack.c.bf16 %v395, %v395
        %v414 = vpack.c.bf16 %v399, %v399
        %v415 = vpack.c.bf16 %v401, %v401
        %v416 = vpack.c.bf16 %v405, %v405
        %v417 = vpack.c.bf16 %v407, %v407
        %419 = vrot.lane.b32.xlu0 %v410, 96
        %v420 = vpop.permute.xlu0 %419
        %vm421 = vcmask 64512
        %v423 = vsel %vm421, %v410, 0
        %v426 = vsel %vm421, %v420, 0
        %428 = vmatprep.subr.bf16.mxu0 0
        %429 = vmatpush1.bf16.xpose.msra.mxu0 %v426
        %430 = vmatprep.subr.bf16.mxu0 0
        %431 = vmatpush1.bf16.xpose.msra.mxu0 0
        %432 = vmatprep.subr.bf16.mxu0 0
        %433 = vmatpush1.bf16.xpose.msra.mxu0 0
        %434 = vmatprep.subr.bf16.mxu0 0
        %435 = vmatpush1.bf16.xpose.msra.mxu0 0
        %436 = vmatprep.subr.bf16.mxu0 0
        %437 = vmatpush1.bf16.xpose.msra.mxu0 0
        %438 = vmatprep.subr.bf16.mxu0 0
        %439 = vmatpush1.bf16.xpose.msra.mxu0 0
        %440 = vmatprep.subr.bf16.mxu0 0
        %441 = vmatpush1.bf16.xpose.msra.mxu0 0
        %442 = vmatprep.subr.bf16.mxu0 0
        %443 = vmatpush1.bf16.xpose.msra.mxu0 0
        %444 = vmatprep.subr.bf16.mxu0 0
        %445 = vmatpush1.bf16.xpose.msra.mxu0 0
        %446 = vmatprep.subr.bf16.mxu0 0
        %447 = vmatpush1.bf16.xpose.msra.mxu0 0
        %448 = vmatprep.subr.bf16.mxu0 0
        %449 = vmatpush1.bf16.xpose.msra.mxu0 0
        %450 = vmatprep.subr.bf16.mxu0 0
        %451 = vmatpush1.bf16.xpose.msra.mxu0 0
        %452 = vmatprep.subr.bf16.mxu0 0
        %453 = vmatpush1.bf16.xpose.msra.mxu0 0
        %454 = vmatprep.subr.bf16.mxu0 0
        %455 = vmatpush1.bf16.xpose.msra.mxu0 0
        %456 = vmatprep.subr.bf16.mxu0 0
        %457 = vmatpush1.bf16.xpose.msra.mxu0 0
        %458 = vmatprep.subr.bf16.mxu0 0
        %459 = vmatpush1.bf16.xpose.msra.mxu0 0
        %460 = vmatprep.mubr.bf16.mxu0 0
        %461 = vmatmul.mubr.bf16.gmra.mrb[0].mxu0 %v423
        %v462 = vpop.f32.mrb[0].mxu0
        %v463 = vadd.f32 0.0, %v462
        %v464 = vpop.f32.mrb[0].mxu0
        %v465 = vpop.f32.mrb[0].mxu0
        %v466 = vpop.f32.mrb[0].mxu0
        %467 = vdwg.mxu0
        %469 = vrot.lane.b32.xlu0 %v411, 96
        %v470 = vpop.permute.xlu0 %469
        %v472 = vsel %vm421, %v411, 0
        %v475 = vsel %vm421, %v470, 0
        %477 = vmatprep.subr.bf16.mxu0 0
        %478 = vmatpush1.bf16.xpose.msra.mxu0 %v475
        %479 = vmatprep.subr.bf16.mxu0 0
        %480 = vmatpush1.bf16.xpose.msra.mxu0 0
        %481 = vmatprep.subr.bf16.mxu0 0
        %482 = vmatpush1.bf16.xpose.msra.mxu0 0
        %483 = vmatprep.subr.bf16.mxu0 0
        %484 = vmatpush1.bf16.xpose.msra.mxu0 0
        %485 = vmatprep.subr.bf16.mxu0 0
        %486 = vmatpush1.bf16.xpose.msra.mxu0 0
        %487 = vmatprep.subr.bf16.mxu0 0
        %488 = vmatpush1.bf16.xpose.msra.mxu0 0
        %489 = vmatprep.subr.bf16.mxu0 0
        %490 = vmatpush1.bf16.xpose.msra.mxu0 0
        %491 = vmatprep.subr.bf16.mxu0 0
        %492 = vmatpush1.bf16.xpose.msra.mxu0 0
        %493 = vmatprep.subr.bf16.mxu0 0
        %494 = vmatpush1.bf16.xpose.msra.mxu0 0
        %495 = vmatprep.subr.bf16.mxu0 0
        %496 = vmatpush1.bf16.xpose.msra.mxu0 0
        %497 = vmatprep.subr.bf16.mxu0 0
        %498 = vmatpush1.bf16.xpose.msra.mxu0 0
        %499 = vmatprep.subr.bf16.mxu0 0
        %500 = vmatpush1.bf16.xpose.msra.mxu0 0
        %501 = vmatprep.subr.bf16.mxu0 0
        %502 = vmatpush1.bf16.xpose.msra.mxu0 0
        %503 = vmatprep.subr.bf16.mxu0 0
        %504 = vmatpush1.bf16.xpose.msra.mxu0 0
        %505 = vmatprep.subr.bf16.mxu0 0
        %506 = vmatpush1.bf16.xpose.msra.mxu0 0
        %507 = vmatprep.subr.bf16.mxu0 0
        %508 = vmatpush1.bf16.xpose.msra.mxu0 0
        %509 = vmatprep.mubr.bf16.mxu0 0
        %510 = vmatmul.mubr.bf16.gmra.mrb[0].mxu0 %v472
        %v511 = vpop.f32.mrb[0].mxu0
        %v512 = vadd.f32 0.0, %v511
        %v513 = vpop.f32.mrb[0].mxu0
        %v514 = vpop.f32.mrb[0].mxu0
        %v515 = vpop.f32.mrb[0].mxu0
        %516 = vdwg.mxu0
        %518 = vrot.lane.b32.xlu0 %v412, 96
        %v519 = vpop.permute.xlu0 %518
        %v521 = vsel %vm421, %v412, 0
        %v524 = vsel %vm421, %v519, 0
        %526 = vmatprep.subr.bf16.mxu0 0
        %527 = vmatpush1.bf16.xpose.msra.mxu0 %v524
        %528 = vmatprep.subr.bf16.mxu0 0
        %529 = vmatpush1.bf16.xpose.msra.mxu0 0
        %530 = vmatprep.subr.bf16.mxu0 0
        %531 = vmatpush1.bf16.xpose.msra.mxu0 0
        %532 = vmatprep.subr.bf16.mxu0 0
        %533 = vmatpush1.bf16.xpose.msra.mxu0 0
        %534 = vmatprep.subr.bf16.mxu0 0
        %535 = vmatpush1.bf16.xpose.msra.mxu0 0
        %536 = vmatprep.subr.bf16.mxu0 0
        %537 = vmatpush1.bf16.xpose.msra.mxu0 0
        %538 = vmatprep.subr.bf16.mxu0 0
        %539 = vmatpush1.bf16.xpose.msra.mxu0 0
        %540 = vmatprep.subr.bf16.mxu0 0
        %541 = vmatpush1.bf16.xpose.msra.mxu0 0
        %542 = vmatprep.subr.bf16.mxu0 0
        %543 = vmatpush1.bf16.xpose.msra.mxu0 0
        %544 = vmatprep.subr.bf16.mxu0 0
        %545 = vmatpush1.bf16.xpose.msra.mxu0 0
        %546 = vmatprep.subr.bf16.mxu0 0
        %547 = vmatpush1.bf16.xpose.msra.mxu0 0
        %548 = vmatprep.subr.bf16.mxu0 0
        %549 = vmatpush1.bf16.xpose.msra.mxu0 0
        %550 = vmatprep.subr.bf16.mxu0 0
        %551 = vmatpush1.bf16.xpose.msra.mxu0 0
        %552 = vmatprep.subr.bf16.mxu0 0
        %553 = vmatpush1.bf16.xpose.msra.mxu0 0
        %554 = vmatprep.subr.bf16.mxu0 0
        %555 = vmatpush1.bf16.xpose.msra.mxu0 0
        %556 = vmatprep.subr.bf16.mxu0 0
        %557 = vmatpush1.bf16.xpose.msra.mxu0 0
        %558 = vmatprep.mubr.bf16.mxu0 0
        %559 = vmatmul.mubr.bf16.gmra.mrb[0].mxu0 %v521
        %v560 = vpop.f32.mrb[0].mxu0
        %v561 = vadd.f32 0.0, %v560
        %v562 = vpop.f32.mrb[0].mxu0
        %v563 = vpop.f32.mrb[0].mxu0
        %v564 = vpop.f32.mrb[0].mxu0
        %565 = vdwg.mxu0
        %567 = vrot.lane.b32.xlu0 %v413, 96
        %v568 = vpop.permute.xlu0 %567
        %v570 = vsel %vm421, %v413, 0
        %v573 = vsel %vm421, %v568, 0
        %575 = vmatprep.subr.bf16.mxu0 0
        %576 = vmatpush1.bf16.xpose.msra.mxu0 %v573
        %577 = vmatprep.subr.bf16.mxu0 0
        %578 = vmatpush1.bf16.xpose.msra.mxu0 0
        %579 = vmatprep.subr.bf16.mxu0 0
        %580 = vmatpush1.bf16.xpose.msra.mxu0 0
        %581 = vmatprep.subr.bf16.mxu0 0
        %582 = vmatpush1.bf16.xpose.msra.mxu0 0
        %583 = vmatprep.subr.bf16.mxu0 0
        %584 = vmatpush1.bf16.xpose.msra.mxu0 0
        %585 = vmatprep.subr.bf16.mxu0 0
        %586 = vmatpush1.bf16.xpose.msra.mxu0 0
        %587 = vmatprep.subr.bf16.mxu0 0
        %588 = vmatpush1.bf16.xpose.msra.mxu0 0
        %589 = vmatprep.subr.bf16.mxu0 0
        %590 = vmatpush1.bf16.xpose.msra.mxu0 0
        %591 = vmatprep.subr.bf16.mxu0 0
        %592 = vmatpush1.bf16.xpose.msra.mxu0 0
        %593 = vmatprep.subr.bf16.mxu0 0
        %594 = vmatpush1.bf16.xpose.msra.mxu0 0
        %595 = vmatprep.subr.bf16.mxu0 0
        %596 = vmatpush1.bf16.xpose.msra.mxu0 0
        %597 = vmatprep.subr.bf16.mxu0 0
        %598 = vmatpush1.bf16.xpose.msra.mxu0 0
        %599 = vmatprep.subr.bf16.mxu0 0
        %600 = vmatpush1.bf16.xpose.msra.mxu0 0
        %601 = vmatprep.subr.bf16.mxu0 0
        %602 = vmatpush1.bf16.xpose.msra.mxu0 0
        %603 = vmatprep.subr.bf16.mxu0 0
        %604 = vmatpush1.bf16.xpose.msra.mxu0 0
        %605 = vmatprep.subr.bf16.mxu0 0
        %606 = vmatpush1.bf16.xpose.msra.mxu0 0
        %607 = vmatprep.mubr.bf16.mxu0 0
        %608 = vmatmul.mubr.bf16.gmra.mrb[0].mxu0 %v570
        %v609 = vpop.f32.mrb[0].mxu0
        %v610 = vadd.f32 0.0, %v609
        %v611 = vpop.f32.mrb[0].mxu0
        %v612 = vpop.f32.mrb[0].mxu0
        %v613 = vpop.f32.mrb[0].mxu0
        %614 = vdwg.mxu0
        %616 = vrot.lane.b32.xlu0 %v414, 96
        %v617 = vpop.permute.xlu0 %616
        %v619 = vsel %vm421, %v414, 0
        %v622 = vsel %vm421, %v617, 0
        %624 = vmatprep.subr.bf16.mxu0 0
        %625 = vmatpush1.bf16.xpose.msra.mxu0 %v622
        %626 = vmatprep.subr.bf16.mxu0 0
        %627 = vmatpush1.bf16.xpose.msra.mxu0 0
        %628 = vmatprep.subr.bf16.mxu0 0
        %629 = vmatpush1.bf16.xpose.msra.mxu0 0
        %630 = vmatprep.subr.bf16.mxu0 0
        %631 = vmatpush1.bf16.xpose.msra.mxu0 0
        %632 = vmatprep.subr.bf16.mxu0 0
        %633 = vmatpush1.bf16.xpose.msra.mxu0 0
        %634 = vmatprep.subr.bf16.mxu0 0
        %635 = vmatpush1.bf16.xpose.msra.mxu0 0
        %636 = vmatprep.subr.bf16.mxu0 0
        %637 = vmatpush1.bf16.xpose.msra.mxu0 0
        %638 = vmatprep.subr.bf16.mxu0 0
        %639 = vmatpush1.bf16.xpose.msra.mxu0 0
        %640 = vmatprep.subr.bf16.mxu0 0
        %641 = vmatpush1.bf16.xpose.msra.mxu0 0
        %642 = vmatprep.subr.bf16.mxu0 0
        %643 = vmatpush1.bf16.xpose.msra.mxu0 0
        %644 = vmatprep.subr.bf16.mxu0 0
        %645 = vmatpush1.bf16.xpose.msra.mxu0 0
        %646 = vmatprep.subr.bf16.mxu0 0
        %647 = vmatpush1.bf16.xpose.msra.mxu0 0
        %648 = vmatprep.subr.bf16.mxu0 0
        %649 = vmatpush1.bf16.xpose.msra.mxu0 0
        %650 = vmatprep.subr.bf16.mxu0 0
        %651 = vmatpush1.bf16.xpose.msra.mxu0 0
        %652 = vmatprep.subr.bf16.mxu0 0
        %653 = vmatpush1.bf16.xpose.msra.mxu0 0
        %654 = vmatprep.subr.bf16.mxu0 0
        %655 = vmatpush1.bf16.xpose.msra.mxu0 0
        %656 = vmatprep.mubr.bf16.mxu0 0
        %657 = vmatmul.mubr.bf16.gmra.mrb[0].mxu0 %v619
        %v658 = vpop.f32.mrb[0].mxu0
        %v659 = vadd.f32 0.0, %v658
        %v660 = vpop.f32.mrb[0].mxu0
        %v661 = vpop.f32.mrb[0].mxu0
        %v662 = vpop.f32.mrb[0].mxu0
        %663 = vdwg.mxu0
        %665 = vrot.lane.b32.xlu0 %v415, 96
        %v666 = vpop.permute.xlu0 %665
        %v668 = vsel %vm421, %v415, 0
        %v671 = vsel %vm421, %v666, 0
        %673 = vmatprep.subr.bf16.mxu0 0
        %674 = vmatpush1.bf16.xpose.msra.mxu0 %v671
        %675 = vmatprep.subr.bf16.mxu0 0
        %676 = vmatpush1.bf16.xpose.msra.mxu0 0
        %677 = vmatprep.subr.bf16.mxu0 0
        %678 = vmatpush1.bf16.xpose.msra.mxu0 0
        %679 = vmatprep.subr.bf16.mxu0 0
        %680 = vmatpush1.bf16.xpose.msra.mxu0 0
        %681 = vmatprep.subr.bf16.mxu0 0
        %682 = vmatpush1.bf16.xpose.msra.mxu0 0
        %683 = vmatprep.subr.bf16.mxu0 0
        %684 = vmatpush1.bf16.xpose.msra.mxu0 0
        %685 = vmatprep.subr.bf16.mxu0 0
        %686 = vmatpush1.bf16.xpose.msra.mxu0 0
        %687 = vmatprep.subr.bf16.mxu0 0
        %688 = vmatpush1.bf16.xpose.msra.mxu0 0
        %689 = vmatprep.subr.bf16.mxu0 0
        %690 = vmatpush1.bf16.xpose.msra.mxu0 0
        %691 = vmatprep.subr.bf16.mxu0 0
        %692 = vmatpush1.bf16.xpose.msra.mxu0 0
        %693 = vmatprep.subr.bf16.mxu0 0
        %694 = vmatpush1.bf16.xpose.msra.mxu0 0
        %695 = vmatprep.subr.bf16.mxu0 0
        %696 = vmatpush1.bf16.xpose.msra.mxu0 0
        %697 = vmatprep.subr.bf16.mxu0 0
        %698 = vmatpush1.bf16.xpose.msra.mxu0 0
        %699 = vmatprep.subr.bf16.mxu0 0
        %700 = vmatpush1.bf16.xpose.msra.mxu0 0
        %701 = vmatprep.subr.bf16.mxu0 0
        %702 = vmatpush1.bf16.xpose.msra.mxu0 0
        %703 = vmatprep.subr.bf16.mxu0 0
        %704 = vmatpush1.bf16.xpose.msra.mxu0 0
        %705 = vmatprep.mubr.bf16.mxu0 0
        %706 = vmatmul.mubr.bf16.gmra.mrb[0].mxu0 %v668
        %v707 = vpop.f32.mrb[0].mxu0
        %v708 = vadd.f32 0.0, %v707
        %v709 = vpop.f32.mrb[0].mxu0
        %v710 = vpop.f32.mrb[0].mxu0
        %v711 = vpop.f32.mrb[0].mxu0
        %712 = vdwg.mxu0
        %714 = vrot.lane.b32.xlu0 %v416, 96
        %v715 = vpop.permute.xlu0 %714
        %v717 = vsel %vm421, %v416, 0
        %v720 = vsel %vm421, %v715, 0
        %722 = vmatprep.subr.bf16.mxu0 0
        %723 = vmatpush1.bf16.xpose.msra.mxu0 %v720
        %724 = vmatprep.subr.bf16.mxu0 0
        %725 = vmatpush1.bf16.xpose.msra.mxu0 0
        %726 = vmatprep.subr.bf16.mxu0 0
        %727 = vmatpush1.bf16.xpose.msra.mxu0 0
        %728 = vmatprep.subr.bf16.mxu0 0
        %729 = vmatpush1.bf16.xpose.msra.mxu0 0
        %730 = vmatprep.subr.bf16.mxu0 0
        %731 = vmatpush1.bf16.xpose.msra.mxu0 0
        %732 = vmatprep.subr.bf16.mxu0 0
        %733 = vmatpush1.bf16.xpose.msra.mxu0 0
        %734 = vmatprep.subr.bf16.mxu0 0
        %735 = vmatpush1.bf16.xpose.msra.mxu0 0
        %736 = vmatprep.subr.bf16.mxu0 0
        %737 = vmatpush1.bf16.xpose.msra.mxu0 0
        %738 = vmatprep.subr.bf16.mxu0 0
        %739 = vmatpush1.bf16.xpose.msra.mxu0 0
        %740 = vmatprep.subr.bf16.mxu0 0
        %741 = vmatpush1.bf16.xpose.msra.mxu0 0
        %742 = vmatprep.subr.bf16.mxu0 0
        %743 = vmatpush1.bf16.xpose.msra.mxu0 0
        %744 = vmatprep.subr.bf16.mxu0 0
        %745 = vmatpush1.bf16.xpose.msra.mxu0 0
        %746 = vmatprep.subr.bf16.mxu0 0
        %747 = vmatpush1.bf16.xpose.msra.mxu0 0
        %748 = vmatprep.subr.bf16.mxu0 0
        %749 = vmatpush1.bf16.xpose.msra.mxu0 0
        %750 = vmatprep.subr.bf16.mxu0 0
        %751 = vmatpush1.bf16.xpose.msra.mxu0 0
        %752 = vmatprep.subr.bf16.mxu0 0
        %753 = vmatpush1.bf16.xpose.msra.mxu0 0
        %754 = vmatprep.mubr.bf16.mxu0 0
        %755 = vmatmul.mubr.bf16.gmra.mrb[0].mxu0 %v717
        %v756 = vpop.f32.mrb[0].mxu0
        %v757 = vadd.f32 0.0, %v756
        %v758 = vpop.f32.mrb[0].mxu0
        %v759 = vpop.f32.mrb[0].mxu0
        %v760 = vpop.f32.mrb[0].mxu0
        %761 = vdwg.mxu0
        %763 = vrot.lane.b32.xlu0 %v417, 96
        %v764 = vpop.permute.xlu0 %763
        %v766 = vsel %vm421, %v417, 0
        %v769 = vsel %vm421, %v764, 0
        %771 = vmatprep.subr.bf16.mxu0 0
        %772 = vmatpush1.bf16.xpose.msra.mxu0 %v769
        %773 = vmatprep.subr.bf16.mxu0 0
        %774 = vmatpush1.bf16.xpose.msra.mxu0 0
        %775 = vmatprep.subr.bf16.mxu0 0
        %776 = vmatpush1.bf16.xpose.msra.mxu0 0
        %777 = vmatprep.subr.bf16.mxu0 0
        %778 = vmatpush1.bf16.xpose.msra.mxu0 0
        %779 = vmatprep.subr.bf16.mxu0 0
        %780 = vmatpush1.bf16.xpose.msra.mxu0 0
        %781 = vmatprep.subr.bf16.mxu0 0
        %782 = vmatpush1.bf16.xpose.msra.mxu0 0
        %783 = vmatprep.subr.bf16.mxu0 0
        %784 = vmatpush1.bf16.xpose.msra.mxu0 0
        %785 = vmatprep.subr.bf16.mxu0 0
        %786 = vmatpush1.bf16.xpose.msra.mxu0 0
        %787 = vmatprep.subr.bf16.mxu0 0
        %788 = vmatpush1.bf16.xpose.msra.mxu0 0
        %789 = vmatprep.subr.bf16.mxu0 0
        %790 = vmatpush1.bf16.xpose.msra.mxu0 0
        %791 = vmatprep.subr.bf16.mxu0 0
        %792 = vmatpush1.bf16.xpose.msra.mxu0 0
        %793 = vmatprep.subr.bf16.mxu0 0
        %794 = vmatpush1.bf16.xpose.msra.mxu0 0
        %795 = vmatprep.subr.bf16.mxu0 0
        %796 = vmatpush1.bf16.xpose.msra.mxu0 0
        %797 = vmatprep.subr.bf16.mxu0 0
        %798 = vmatpush1.bf16.xpose.msra.mxu0 0
        %799 = vmatprep.subr.bf16.mxu0 0
        %800 = vmatpush1.bf16.xpose.msra.mxu0 0
        %801 = vmatprep.subr.bf16.mxu0 0
        %802 = vmatpush1.bf16.xpose.msra.mxu0 0
        %803 = vmatprep.mubr.bf16.mxu0 0
        %804 = vmatmul.mubr.bf16.gmra.mrb[0].mxu0 %v766
        %v805 = vpop.f32.mrb[0].mxu0
        %v806 = vadd.f32 0.0, %v805
        %v807 = vpop.f32.mrb[0].mxu0
        %v808 = vpop.f32.mrb[0].mxu0
        %v809 = vpop.f32.mrb[0].mxu0
        %810 = vdwg.mxu0
        %v811 = vmul.f32 %v463, 0.35355338
        %v812 = vmul.f32 %v512, 0.35355338
        %v813 = vmul.f32 %v561, 0.35355338
        %v814 = vmul.f32 %v610, 0.35355338
        %v815 = vmul.f32 %v659, 0.35355338
        %v816 = vmul.f32 %v708, 0.35355338
        %v817 = vmul.f32 %v757, 0.35355338
        %v818 = vmul.f32 %v806, 0.35355338
        %v819 = vadd.f32 %v811, %v251
        %v820 = vadd.f32 %v812, %v252
        %v821 = vadd.f32 %v813, %v251
        %v822 = vadd.f32 %v814, %v252
        %v823 = vadd.f32 %v815, %v251
        %v824 = vadd.f32 %v816, %v252
        %v825 = vadd.f32 %v817, %v251
        %v826 = vadd.f32 %v818, %v252
        %v827 = vsel %vm421, %v819, -inf
        %828 = vmax.xlane.f32.xlu0 %v827
        %v829 = vpop.xlane.xlu0 %828
        %v830 = vsel %vm421, %v820, -inf
        %831 = vmax.xlane.f32.xlu0 %v830
        %v832 = vpop.xlane.xlu0 %831
        %v833 = vsel %vm421, %v821, -inf
        %834 = vmax.xlane.f32.xlu0 %v833
        %v835 = vpop.xlane.xlu0 %834
        %v836 = vsel %vm421, %v822, -inf
        %837 = vmax.xlane.f32.xlu0 %v836
        %v838 = vpop.xlane.xlu0 %837
        %v839 = vsel %vm421, %v823, -inf
        %840 = vmax.xlane.f32.xlu0 %v839
        %v841 = vpop.xlane.xlu0 %840
        %v842 = vsel %vm421, %v824, -inf
        %843 = vmax.xlane.f32.xlu0 %v842
        %v844 = vpop.xlane.xlu0 %843
        %v845 = vsel %vm421, %v825, -inf
        %846 = vmax.xlane.f32.xlu0 %v845
        %v847 = vpop.xlane.xlu0 %846
        %v848 = vsel %vm421, %v826, -inf
        %849 = vmax.xlane.f32.xlu0 %v848
        %v850 = vpop.xlane.xlu0 %849
        %v851 = vsub.f32 %v819, %v829
        %v852 = vsub.f32 %v820, %v832
        %v853 = vsub.f32 %v821, %v835
        %v854 = vsub.f32 %v822, %v838
        %v855 = vsub.f32 %v823, %v841
        %v856 = vsub.f32 %v824, %v844
        %v857 = vsub.f32 %v825, %v847
        %v858 = vsub.f32 %v826, %v850
        %v859 = vmul.f32 %v851, 1.442695
        %v860 = vpow.pop %v859
        %v861 = vmul.f32 %v852, 1.442695
        %v862 = vpow.pop %v861
        %v863 = vmul.f32 %v853, 1.442695
        %v864 = vpow.pop %v863
        %v865 = vmul.f32 %v854, 1.442695
        %v866 = vpow.pop %v865
        %v867 = vmul.f32 %v855, 1.442695
        %v868 = vpow.pop %v867
        %v869 = vmul.f32 %v856, 1.442695
        %v870 = vpow.pop %v869
        %v871 = vmul.f32 %v857, 1.442695
        %v872 = vpow.pop %v871
        %v873 = vmul.f32 %v858, 1.442695
        %v874 = vpow.pop %v873
        %v875 = vsel %vm421, %v860, 0.0
        %876 = vadd.xlane.f32.xlu0 %v875
        %v877 = vpop.xlane.xlu0 %876
        %v878 = vsel %vm421, %v862, 0.0
        %879 = vadd.xlane.f32.xlu0 %v878
        %v880 = vpop.xlane.xlu0 %879
        %v881 = vsel %vm421, %v864, 0.0
        %882 = vadd.xlane.f32.xlu0 %v881
        %v883 = vpop.xlane.xlu0 %882
        %v884 = vsel %vm421, %v866, 0.0
        %885 = vadd.xlane.f32.xlu0 %v884
        %v886 = vpop.xlane.xlu0 %885
        %v887 = vsel %vm421, %v868, 0.0
        %888 = vadd.xlane.f32.xlu0 %v887
        %v889 = vpop.xlane.xlu0 %888
        %v890 = vsel %vm421, %v870, 0.0
        %891 = vadd.xlane.f32.xlu0 %v890
        %v892 = vpop.xlane.xlu0 %891
        %v893 = vsel %vm421, %v872, 0.0
        %894 = vadd.xlane.f32.xlu0 %v893
        %v895 = vpop.xlane.xlu0 %894
        %v896 = vsel %vm421, %v874, 0.0
        %897 = vadd.xlane.f32.xlu0 %v896
        %v898 = vpop.xlane.xlu0 %897
        %v899 = vrcp.pop %v877
        %v900 = vrcp.pop %v880
        %v901 = vrcp.pop %v883
        %v902 = vrcp.pop %v886
        %v903 = vrcp.pop %v889
        %v904 = vrcp.pop %v892
        %v905 = vrcp.pop %v895
        %v906 = vrcp.pop %v898
        %v907 = vmul.f32 %v860, %v899
        %v908 = vmul.f32 %v862, %v900
        %v909 = vmul.f32 %v864, %v901
        %v910 = vmul.f32 %v866, %v902
        %v911 = vmul.f32 %v868, %v903
        %v912 = vmul.f32 %v870, %v904
        %v913 = vmul.f32 %v872, %v905
        %v914 = vmul.f32 %v874, %v906
        %v915 = vpack.c.bf16 %v907, %v907
        %v916 = vpack.c.bf16 %v908, %v908
        %v917 = vpack.c.bf16 %v909, %v909
        %v918 = vpack.c.bf16 %v910, %v910
        %v919 = vpack.c.bf16 %v911, %v911
        %v920 = vpack.c.bf16 %v912, %v912
        %v921 = vpack.c.bf16 %v913, %v913
        %v922 = vpack.c.bf16 %v914, %v914
        %923 = vrot.lane.b32.xlu0 %v410, 64
        %v924 = vpop.permute.xlu0 %923
        %v926 = vsel %vm421, %v915, 0
        %vm928 = vcmask 1043456
        %v930 = vsel %vm928, %v924, 0
        %932 = vmatprep.subr.bf16.mxu0 0
        %933 = vmatpush1.bf16.msra.mxu0 %v930
        %934 = vmatprep.subr.bf16.mxu0 0
        %935 = vmatpush1.bf16.msra.mxu0 0
        %936 = vmatprep.subr.bf16.mxu0 0
        %937 = vmatpush1.bf16.msra.mxu0 0
        %938 = vmatprep.subr.bf16.mxu0 0
        %939 = vmatpush1.bf16.msra.mxu0 0
        %940 = vmatprep.subr.bf16.mxu0 0
        %941 = vmatpush1.bf16.msra.mxu0 0
        %942 = vmatprep.subr.bf16.mxu0 0
        %943 = vmatpush1.bf16.msra.mxu0 0
        %944 = vmatprep.subr.bf16.mxu0 0
        %945 = vmatpush1.bf16.msra.mxu0 0
        %946 = vmatprep.subr.bf16.mxu0 0
        %947 = vmatpush1.bf16.msra.mxu0 0
        %948 = vmatprep.subr.bf16.mxu0 0
        %949 = vmatpush1.bf16.msra.mxu0 0
        %950 = vmatprep.subr.bf16.mxu0 0
        %951 = vmatpush1.bf16.msra.mxu0 0
        %952 = vmatprep.subr.bf16.mxu0 0
        %953 = vmatpush1.bf16.msra.mxu0 0
        %954 = vmatprep.subr.bf16.mxu0 0
        %955 = vmatpush1.bf16.msra.mxu0 0
        %956 = vmatprep.subr.bf16.mxu0 0
        %957 = vmatpush1.bf16.msra.mxu0 0
        %958 = vmatprep.subr.bf16.mxu0 0
        %959 = vmatpush1.bf16.msra.mxu0 0
        %960 = vmatprep.subr.bf16.mxu0 0
        %961 = vmatpush1.bf16.msra.mxu0 0
        %962 = vmatprep.subr.bf16.mxu0 0
        %963 = vmatpush1.bf16.msra.mxu0 0
        %964 = vmatprep.mubr.bf16.mxu0 0
        %965 = vmatmul.mubr.bf16.gmra.mrb[0].mxu0 %v926
        %v966 = vpop.f32.mrb[0].mxu0
        %v967 = vadd.f32 0.0, %v966
        %v968 = vpop.f32.mrb[0].mxu0
        %v969 = vpop.f32.mrb[0].mxu0
        %v970 = vpop.f32.mrb[0].mxu0
        %971 = vdwg.mxu0
        %972 = vrot.lane.b32.xlu0 %v411, 64
        %v973 = vpop.permute.xlu0 %972
        %v975 = vsel %vm421, %v916, 0
        %v978 = vsel %vm928, %v973, 0
        %980 = vmatprep.subr.bf16.mxu0 0
        %981 = vmatpush1.bf16.msra.mxu0 %v978
        %982 = vmatprep.subr.bf16.mxu0 0
        %983 = vmatpush1.bf16.msra.mxu0 0
        %984 = vmatprep.subr.bf16.mxu0 0
        %985 = vmatpush1.bf16.msra.mxu0 0
        %986 = vmatprep.subr.bf16.mxu0 0
        %987 = vmatpush1.bf16.msra.mxu0 0
        %988 = vmatprep.subr.bf16.mxu0 0
        %989 = vmatpush1.bf16.msra.mxu0 0
        %990 = vmatprep.subr.bf16.mxu0 0
        %991 = vmatpush1.bf16.msra.mxu0 0
        %992 = vmatprep.subr.bf16.mxu0 0
        %993 = vmatpush1.bf16.msra.mxu0 0
        %994 = vmatprep.subr.bf16.mxu0 0
        %995 = vmatpush1.bf16.msra.mxu0 0
        %996 = vmatprep.subr.bf16.mxu0 0
        %997 = vmatpush1.bf16.msra.mxu0 0
        %998 = vmatprep.subr.bf16.mxu0 0
        %999 = vmatpush1.bf16.msra.mxu0 0
        %1000 = vmatprep.subr.bf16.mxu0 0
        %1001 = vmatpush1.bf16.msra.mxu0 0
        %1002 = vmatprep.subr.bf16.mxu0 0
        %1003 = vmatpush1.bf16.msra.mxu0 0
        %1004 = vmatprep.subr.bf16.mxu0 0
        %1005 = vmatpush1.bf16.msra.mxu0 0
        %1006 = vmatprep.subr.bf16.mxu0 0
        %1007 = vmatpush1.bf16.msra.mxu0 0
        %1008 = vmatprep.subr.bf16.mxu0 0
        %1009 = vmatpush1.bf16.msra.mxu0 0
        %1010 = vmatprep.subr.bf16.mxu0 0
        %1011 = vmatpush1.bf16.msra.mxu0 0
        %1012 = vmatprep.mubr.bf16.mxu0 0
        %1013 = vmatmul.mubr.bf16.gmra.mrb[0].mxu0 %v975
        %v1014 = vpop.f32.mrb[0].mxu0
        %v1015 = vadd.f32 0.0, %v1014
        %v1016 = vpop.f32.mrb[0].mxu0
        %v1017 = vpop.f32.mrb[0].mxu0
        %v1018 = vpop.f32.mrb[0].mxu0
        %1019 = vdwg.mxu0
        %1020 = vrot.lane.b32.xlu0 %v412, 64
        %v1021 = vpop.permute.xlu0 %1020
        %v1023 = vsel %vm421, %v917, 0
        %v1026 = vsel %vm928, %v1021, 0
        %1028 = vmatprep.subr.bf16.mxu0 0
        %1029 = vmatpush1.bf16.msra.mxu0 %v1026
        %1030 = vmatprep.subr.bf16.mxu0 0
        %1031 = vmatpush1.bf16.msra.mxu0 0
        %1032 = vmatprep.subr.bf16.mxu0 0
        %1033 = vmatpush1.bf16.msra.mxu0 0
        %1034 = vmatprep.subr.bf16.mxu0 0
        %1035 = vmatpush1.bf16.msra.mxu0 0
        %1036 = vmatprep.subr.bf16.mxu0 0
        %1037 = vmatpush1.bf16.msra.mxu0 0
        %1038 = vmatprep.subr.bf16.mxu0 0
        %1039 = vmatpush1.bf16.msra.mxu0 0
        %1040 = vmatprep.subr.bf16.mxu0 0
        %1041 = vmatpush1.bf16.msra.mxu0 0
        %1042 = vmatprep.subr.bf16.mxu0 0
        %1043 = vmatpush1.bf16.msra.mxu0 0
        %1044 = vmatprep.subr.bf16.mxu0 0
        %1045 = vmatpush1.bf16.msra.mxu0 0
        %1046 = vmatprep.subr.bf16.mxu0 0
        %1047 = vmatpush1.bf16.msra.mxu0 0
        %1048 = vmatprep.subr.bf16.mxu0 0
        %1049 = vmatpush1.bf16.msra.mxu0 0
        %1050 = vmatprep.subr.bf16.mxu0 0
        %1051 = vmatpush1.bf16.msra.mxu0 0
        %1052 = vmatprep.subr.bf16.mxu0 0
        %1053 = vmatpush1.bf16.msra.mxu0 0
        %1054 = vmatprep.subr.bf16.mxu0 0
        %1055 = vmatpush1.bf16.msra.mxu0 0
        %1056 = vmatprep.subr.bf16.mxu0 0
        %1057 = vmatpush1.bf16.msra.mxu0 0
        %1058 = vmatprep.subr.bf16.mxu0 0
        %1059 = vmatpush1.bf16.msra.mxu0 0
        %1060 = vmatprep.mubr.bf16.mxu0 0
        %1061 = vmatmul.mubr.bf16.gmra.mrb[0].mxu0 %v1023
        %v1062 = vpop.f32.mrb[0].mxu0
        %v1063 = vadd.f32 0.0, %v1062
        %v1064 = vpop.f32.mrb[0].mxu0
        %v1065 = vpop.f32.mrb[0].mxu0
        %v1066 = vpop.f32.mrb[0].mxu0
        %1067 = vdwg.mxu0
        %1068 = vrot.lane.b32.xlu0 %v413, 64
        %v1069 = vpop.permute.xlu0 %1068
        %v1071 = vsel %vm421, %v918, 0
        %v1074 = vsel %vm928, %v1069, 0
        %1076 = vmatprep.subr.bf16.mxu0 0
        %1077 = vmatpush1.bf16.msra.mxu0 %v1074
        %1078 = vmatprep.subr.bf16.mxu0 0
        %1079 = vmatpush1.bf16.msra.mxu0 0
        %1080 = vmatprep.subr.bf16.mxu0 0
        %1081 = vmatpush1.bf16.msra.mxu0 0
        %1082 = vmatprep.subr.bf16.mxu0 0
        %1083 = vmatpush1.bf16.msra.mxu0 0
        %1084 = vmatprep.subr.bf16.mxu0 0
        %1085 = vmatpush1.bf16.msra.mxu0 0
        %1086 = vmatprep.subr.bf16.mxu0 0
        %1087 = vmatpush1.bf16.msra.mxu0 0
        %1088 = vmatprep.subr.bf16.mxu0 0
        %1089 = vmatpush1.bf16.msra.mxu0 0
        %1090 = vmatprep.subr.bf16.mxu0 0
        %1091 = vmatpush1.bf16.msra.mxu0 0
        %1092 = vmatprep.subr.bf16.mxu0 0
        %1093 = vmatpush1.bf16.msra.mxu0 0
        %1094 = vmatprep.subr.bf16.mxu0 0
        %1095 = vmatpush1.bf16.msra.mxu0 0
        %1096 = vmatprep.subr.bf16.mxu0 0
        %1097 = vmatpush1.bf16.msra.mxu0 0
        %1098 = vmatprep.subr.bf16.mxu0 0
        %1099 = vmatpush1.bf16.msra.mxu0 0
        %1100 = vmatprep.subr.bf16.mxu0 0
        %1101 = vmatpush1.bf16.msra.mxu0 0
        %1102 = vmatprep.subr.bf16.mxu0 0
        %1103 = vmatpush1.bf16.msra.mxu0 0
        %1104 = vmatprep.subr.bf16.mxu0 0
        %1105 = vmatpush1.bf16.msra.mxu0 0
        %1106 = vmatprep.subr.bf16.mxu0 0
        %1107 = vmatpush1.bf16.msra.mxu0 0
        %1108 = vmatprep.mubr.bf16.mxu0 0
        %1109 = vmatmul.mubr.bf16.gmra.mrb[0].mxu0 %v1071
        %v1110 = vpop.f32.mrb[0].mxu0
        %v1111 = vadd.f32 0.0, %v1110
        %v1112 = vpop.f32.mrb[0].mxu0
        %v1113 = vpop.f32.mrb[0].mxu0
        %v1114 = vpop.f32.mrb[0].mxu0
        %1115 = vdwg.mxu0
        %1116 = vrot.lane.b32.xlu0 %v414, 64
        %v1117 = vpop.permute.xlu0 %1116
        %v1119 = vsel %vm421, %v919, 0
        %v1122 = vsel %vm928, %v1117, 0
        %1124 = vmatprep.subr.bf16.mxu0 0
        %1125 = vmatpush1.bf16.msra.mxu0 %v1122
        %1126 = vmatprep.subr.bf16.mxu0 0
        %1127 = vmatpush1.bf16.msra.mxu0 0
        %1128 = vmatprep.subr.bf16.mxu0 0
        %1129 = vmatpush1.bf16.msra.mxu0 0
        %1130 = vmatprep.subr.bf16.mxu0 0
        %1131 = vmatpush1.bf16.msra.mxu0 0
        %1132 = vmatprep.subr.bf16.mxu0 0
        %1133 = vmatpush1.bf16.msra.mxu0 0
        %1134 = vmatprep.subr.bf16.mxu0 0
        %1135 = vmatpush1.bf16.msra.mxu0 0
        %1136 = vmatprep.subr.bf16.mxu0 0
        %1137 = vmatpush1.bf16.msra.mxu0 0
        %1138 = vmatprep.subr.bf16.mxu0 0
        %1139 = vmatpush1.bf16.msra.mxu0 0
        %1140 = vmatprep.subr.bf16.mxu0 0
        %1141 = vmatpush1.bf16.msra.mxu0 0
        %1142 = vmatprep.subr.bf16.mxu0 0
        %1143 = vmatpush1.bf16.msra.mxu0 0
        %1144 = vmatprep.subr.bf16.mxu0 0
        %1145 = vmatpush1.bf16.msra.mxu0 0
        %1146 = vmatprep.subr.bf16.mxu0 0
        %1147 = vmatpush1.bf16.msra.mxu0 0
        %1148 = vmatprep.subr.bf16.mxu0 0
        %1149 = vmatpush1.bf16.msra.mxu0 0
        %1150 = vmatprep.subr.bf16.mxu0 0
        %1151 = vmatpush1.bf16.msra.mxu0 0
        %1152 = vmatprep.subr.bf16.mxu0 0
        %1153 = vmatpush1.bf16.msra.mxu0 0
        %1154 = vmatprep.subr.bf16.mxu0 0
        %1155 = vmatpush1.bf16.msra.mxu0 0
        %1156 = vmatprep.mubr.bf16.mxu0 0
        %1157 = vmatmul.mubr.bf16.gmra.mrb[0].mxu0 %v1119
        %v1158 = vpop.f32.mrb[0].mxu0
        %v1159 = vadd.f32 0.0, %v1158
        %v1160 = vpop.f32.mrb[0].mxu0
        %v1161 = vpop.f32.mrb[0].mxu0
        %v1162 = vpop.f32.mrb[0].mxu0
        %1163 = vdwg.mxu0
        %1164 = vrot.lane.b32.xlu0 %v415, 64
        %v1165 = vpop.permute.xlu0 %1164
        %v1167 = vsel %vm421, %v920, 0
        %v1170 = vsel %vm928, %v1165, 0
        %1172 = vmatprep.subr.bf16.mxu0 0
        %1173 = vmatpush1.bf16.msra.mxu0 %v1170
        %1174 = vmatprep.subr.bf16.mxu0 0
        %1175 = vmatpush1.bf16.msra.mxu0 0
        %1176 = vmatprep.subr.bf16.mxu0 0
        %1177 = vmatpush1.bf16.msra.mxu0 0
        %1178 = vmatprep.subr.bf16.mxu0 0
        %1179 = vmatpush1.bf16.msra.mxu0 0
        %1180 = vmatprep.subr.bf16.mxu0 0
        %1181 = vmatpush1.bf16.msra.mxu0 0
        %1182 = vmatprep.subr.bf16.mxu0 0
        %1183 = vmatpush1.bf16.msra.mxu0 0
        %1184 = vmatprep.subr.bf16.mxu0 0
        %1185 = vmatpush1.bf16.msra.mxu0 0
        %1186 = vmatprep.subr.bf16.mxu0 0
        %1187 = vmatpush1.bf16.msra.mxu0 0
        %1188 = vmatprep.subr.bf16.mxu0 0
        %1189 = vmatpush1.bf16.msra.mxu0 0
        %1190 = vmatprep.subr.bf16.mxu0 0
        %1191 = vmatpush1.bf16.msra.mxu0 0
        %1192 = vmatprep.subr.bf16.mxu0 0
        %1193 = vmatpush1.bf16.msra.mxu0 0
        %1194 = vmatprep.subr.bf16.mxu0 0
        %1195 = vmatpush1.bf16.msra.mxu0 0
        %1196 = vmatprep.subr.bf16.mxu0 0
        %1197 = vmatpush1.bf16.msra.mxu0 0
        %1198 = vmatprep.subr.bf16.mxu0 0
        %1199 = vmatpush1.bf16.msra.mxu0 0
        %1200 = vmatprep.subr.bf16.mxu0 0
        %1201 = vmatpush1.bf16.msra.mxu0 0
        %1202 = vmatprep.subr.bf16.mxu0 0
        %1203 = vmatpush1.bf16.msra.mxu0 0
        %1204 = vmatprep.mubr.bf16.mxu0 0
        %1205 = vmatmul.mubr.bf16.gmra.mrb[0].mxu0 %v1167
        %v1206 = vpop.f32.mrb[0].mxu0
        %v1207 = vadd.f32 0.0, %v1206
        %v1208 = vpop.f32.mrb[0].mxu0
        %v1209 = vpop.f32.mrb[0].mxu0
        %v1210 = vpop.f32.mrb[0].mxu0
        %1211 = vdwg.mxu0
        %1212 = vrot.lane.b32.xlu0 %v416, 64
        %v1213 = vpop.permute.xlu0 %1212
        %v1215 = vsel %vm421, %v921, 0
        %v1218 = vsel %vm928, %v1213, 0
        %1220 = vmatprep.subr.bf16.mxu0 0
        %1221 = vmatpush1.bf16.msra.mxu0 %v1218
        %1222 = vmatprep.subr.bf16.mxu0 0
        %1223 = vmatpush1.bf16.msra.mxu0 0
        %1224 = vmatprep.subr.bf16.mxu0 0
        %1225 = vmatpush1.bf16.msra.mxu0 0
        %1226 = vmatprep.subr.bf16.mxu0 0
        %1227 = vmatpush1.bf16.msra.mxu0 0
        %1228 = vmatprep.subr.bf16.mxu0 0
        %1229 = vmatpush1.bf16.msra.mxu0 0
        %1230 = vmatprep.subr.bf16.mxu0 0
        %1231 = vmatpush1.bf16.msra.mxu0 0
        %1232 = vmatprep.subr.bf16.mxu0 0
        %1233 = vmatpush1.bf16.msra.mxu0 0
        %1234 = vmatprep.subr.bf16.mxu0 0
        %1235 = vmatpush1.bf16.msra.mxu0 0
        %1236 = vmatprep.subr.bf16.mxu0 0
        %1237 = vmatpush1.bf16.msra.mxu0 0
        %1238 = vmatprep.subr.bf16.mxu0 0
        %1239 = vmatpush1.bf16.msra.mxu0 0
        %1240 = vmatprep.subr.bf16.mxu0 0
        %1241 = vmatpush1.bf16.msra.mxu0 0
        %1242 = vmatprep.subr.bf16.mxu0 0
        %1243 = vmatpush1.bf16.msra.mxu0 0
        %1244 = vmatprep.subr.bf16.mxu0 0
        %1245 = vmatpush1.bf16.msra.mxu0 0
        %1246 = vmatprep.subr.bf16.mxu0 0
        %1247 = vmatpush1.bf16.msra.mxu0 0
        %1248 = vmatprep.subr.bf16.mxu0 0
        %1249 = vmatpush1.bf16.msra.mxu0 0
        %1250 = vmatprep.subr.bf16.mxu0 0
        %1251 = vmatpush1.bf16.msra.mxu0 0
        %1252 = vmatprep.mubr.bf16.mxu0 0
        %1253 = vmatmul.mubr.bf16.gmra.mrb[0].mxu0 %v1215
        %v1254 = vpop.f32.mrb[0].mxu0
        %v1255 = vadd.f32 0.0, %v1254
        %v1256 = vpop.f32.mrb[0].mxu0
        %v1257 = vpop.f32.mrb[0].mxu0
        %v1258 = vpop.f32.mrb[0].mxu0
        %1259 = vdwg.mxu0
        %1260 = vrot.lane.b32.xlu0 %v417, 64
        %v1261 = vpop.permute.xlu0 %1260
        %v1263 = vsel %vm421, %v922, 0
        %v1266 = vsel %vm928, %v1261, 0
        %1268 = vmatprep.subr.bf16.mxu0 0
        %1269 = vmatpush1.bf16.msra.mxu0 %v1266
        %1270 = vmatprep.subr.bf16.mxu0 0
        %1271 = vmatpush1.bf16.msra.mxu0 0
        %1272 = vmatprep.subr.bf16.mxu0 0
        %1273 = vmatpush1.bf16.msra.mxu0 0
        %1274 = vmatprep.subr.bf16.mxu0 0
        %1275 = vmatpush1.bf16.msra.mxu0 0
        %1276 = vmatprep.subr.bf16.mxu0 0
        %1277 = vmatpush1.bf16.msra.mxu0 0
        %1278 = vmatprep.subr.bf16.mxu0 0
        %1279 = vmatpush1.bf16.msra.mxu0 0
        %1280 = vmatprep.subr.bf16.mxu0 0
        %1281 = vmatpush1.bf16.msra.mxu0 0
        %1282 = vmatprep.subr.bf16.mxu0 0
        %1283 = vmatpush1.bf16.msra.mxu0 0
        %1284 = vmatprep.subr.bf16.mxu0 0
        %1285 = vmatpush1.bf16.msra.mxu0 0
        %1286 = vmatprep.subr.bf16.mxu0 0
        %1287 = vmatpush1.bf16.msra.mxu0 0
        %1288 = vmatprep.subr.bf16.mxu0 0
        %1289 = vmatpush1.bf16.msra.mxu0 0
        %1290 = vmatprep.subr.bf16.mxu0 0
        %1291 = vmatpush1.bf16.msra.mxu0 0
        %1292 = vmatprep.subr.bf16.mxu0 0
        %1293 = vmatpush1.bf16.msra.mxu0 0
        %1294 = vmatprep.subr.bf16.mxu0 0
        %1295 = vmatpush1.bf16.msra.mxu0 0
        %1296 = vmatprep.subr.bf16.mxu0 0
        %1297 = vmatpush1.bf16.msra.mxu0 0
        %1298 = vmatprep.subr.bf16.mxu0 0
        %1299 = vmatpush1.bf16.msra.mxu0 0
        %1300 = vmatprep.mubr.bf16.mxu0 0
        %1301 = vmatmul.mubr.bf16.gmra.mrb[0].mxu0 %v1263
        %v1302 = vpop.f32.mrb[0].mxu0
        %v1303 = vadd.f32 0.0, %v1302
        %v1304 = vpop.f32.mrb[0].mxu0
        %v1305 = vpop.f32.mrb[0].mxu0
        %v1306 = vpop.f32.mrb[0].mxu0
        %1307 = vdwg.mxu0
        %1310 = vrot.lane.b32.xlu0 %v1063, 8
        %v1311 = vpop.permute.xlu0 %1310
        %1312 = vrot.lane.b32.xlu0 %v1111, 8
        %v1313 = vpop.permute.xlu0 %1312
        %1318 = vrot.lane.b32.xlu0 %v1159, 16
        %v1319 = vpop.permute.xlu0 %1318
        %1320 = vrot.lane.b32.xlu0 %v1207, 16
        %v1321 = vpop.permute.xlu0 %1320
        %1326 = vrot.lane.b32.xlu0 %v1255, 24
        %v1327 = vpop.permute.xlu0 %1326
        %1328 = vrot.lane.b32.xlu0 %v1303, 24
        %v1329 = vpop.permute.xlu0 %1328
        %v1332 = vsel %vm421, %v967, %v1311
        %v1333 = vsel %vm421, %v1015, %v1313
        %vm1334 = vcmask 130048
        %v1335 = vsel %vm1334, %v1332, %v1319
        %v1336 = vsel %vm1334, %v1333, %v1321
        %vm1337 = vcmask 195584
        %v1338 = vsel %vm1337, %v1335, %v1327
        %v1339 = vsel %vm1337, %v1336, %v1329
        %v1340 = vpack.c.bf16 %v1339, %v1338
        %v1341 = vlaneseq
        %v1342 = vshrl.u32 %v1341, 7
        %v1343 = vsub.s32 3, %v1342
        %v1344 = vrot.slane %v287, %v1343
        %v1349 = vunpack.c.l.b16 %v257
        %v1350 = vunpack.c.l.b16 %v258
        %v1351 = vunpack.c.l.b16 %v259
        %v1352 = vunpack.c.l.b16 %v260
        %v1353 = vpack.c.b16 %v1350, %v1349
        %v1354 = vpack.c.b16 %v1352, %v1351
        %v1358 = vsel %vm289, %v1340, 0
        %1360 = vmatprep.subr.bf16.mxu0 0
        %1361 = vmatpush1.bf16.msra.mxu0 %v1353
        %1362 = vmatprep.subr.bf16.mxu0 0
        %1363 = vmatpush1.bf16.msra.mxu0 %v1354
        %1364 = vmatprep.subr.bf16.mxu0 0
        %1365 = vmatpush1.bf16.msra.mxu0 0
        %1366 = vmatprep.subr.bf16.mxu0 0
        %1367 = vmatpush1.bf16.msra.mxu0 0
        %1368 = vmatprep.subr.bf16.mxu0 0
        %1369 = vmatpush1.bf16.msra.mxu0 0
        %1370 = vmatprep.subr.bf16.mxu0 0
        %1371 = vmatpush1.bf16.msra.mxu0 0
        %1372 = vmatprep.subr.bf16.mxu0 0
        %1373 = vmatpush1.bf16.msra.mxu0 0
        %1374 = vmatprep.subr.bf16.mxu0 0
        %1375 = vmatpush1.bf16.msra.mxu0 0
        %1376 = vmatprep.subr.bf16.mxu0 0
        %1377 = vmatpush1.bf16.msra.mxu0 0
        %1378 = vmatprep.subr.bf16.mxu0 0
        %1379 = vmatpush1.bf16.msra.mxu0 0
        %1380 = vmatprep.subr.bf16.mxu0 0
        %1381 = vmatpush1.bf16.msra.mxu0 0
        %1382 = vmatprep.subr.bf16.mxu0 0
        %1383 = vmatpush1.bf16.msra.mxu0 0
        %1384 = vmatprep.subr.bf16.mxu0 0
        %1385 = vmatpush1.bf16.msra.mxu0 0
        %1386 = vmatprep.subr.bf16.mxu0 0
        %1387 = vmatpush1.bf16.msra.mxu0 0
        %1388 = vmatprep.subr.bf16.mxu0 0
        %1389 = vmatpush1.bf16.msra.mxu0 0
        %1390 = vmatprep.subr.bf16.mxu0 0
        %1391 = vmatpush1.bf16.msra.mxu0 0
        %1392 = vmatprep.mubr.bf16.mxu0 0
        %1393 = vmatmul.mubr.bf16.gmra.mrb[0].mxu0 %v1358
        %v1394 = vpop.f32.mrb[0].mxu0
        %v1395 = vadd.f32 %v1344, %v1394
        %v1396 = vpop.f32.mrb[0].mxu0
        %v1397 = vpop.f32.mrb[0].mxu0
        %v1398 = vadd.f32 %v1344, %v1397
        %v1399 = vpop.f32.mrb[0].mxu0
        %1400 = vdwg.mxu0
        %v1401 = vadd.f32 %v249, %v1395
        %v1402 = vadd.f32 %v250, %v1398
        %v1403 = vsel %vm289, %v1401, 0.0
        %1404 = vadd.xlane.f32.xlu0 %v1403
        %v1405 = vpop.xlane.xlu0 %1404
        %v1406 = vsel %vm289, %v1402, 0.0
        %1407 = vadd.xlane.f32.xlu0 %v1406
        %v1408 = vpop.xlane.xlu0 %1407
        %v1409 = vmul.f32 %v1405, %v296
        %v1410 = vmul.f32 %v1408, %v296
        %v1411 = vsub.f32 %v1401, %v1409
        %v1412 = vsub.f32 %v1402, %v1410
        %v1413 = vmul.f32 %v1411, %v1411
        %v1414 = vmul.f32 %v1412, %v1412
        %v1415 = vsel %vm289, %v1413, 0.0
        %1416 = vadd.xlane.f32.xlu0 %v1415
        %v1417 = vpop.xlane.xlu0 %1416
        %v1418 = vsel %vm289, %v1414, 0.0
        %1419 = vadd.xlane.f32.xlu0 %v1418
        %v1420 = vpop.xlane.xlu0 %1419
        %v1421 = vmul.f32 %v1417, %v296
        %v1422 = vmul.f32 %v1420, %v296
        %v1423 = vadd.f32 %v1421, 1e-05
        %v1424 = vadd.f32 %v1422, 1e-05
        %v1425 = vrsqrt.pop %v1423
        %v1426 = vrsqrt.pop %v1424
        %v1427 = vmul.f32 %v1411, %v1425
        %v1428 = vmul.f32 %v1412, %v1426
        %v1429 = vlaneseq
        %v1430 = vshrl.u32 %v1429, 7
        %v1431 = vsub.s32 4, %v1430
        %v1432 = vrot.slane %v287, %v1431
        %v1433 = vmul.f32 %v1427, %v1432
        %v1434 = vmul.f32 %v1428, %v1432
        %v1435 = vlaneseq
        %v1436 = vshrl.u32 %v1435, 7
        %v1437 = vsub.s32 5, %v1436
        %v1438 = vrot.slane %v287, %v1437
        %v1439 = vadd.f32 %v1433, %v1438
        %v1440 = vadd.f32 %v1434, %v1438
        %v1441 = vpack.c.bf16 %v1440, %v1439
        %v1442 = vlaneseq
        %v1443 = vshrl.u32 %v1442, 7
        %v1444 = vsub.s32 6, %v1443
        %v1445 = vrot.slane %v287, %v1444
        %v1450 = vunpack.c.l.b16 %v261
        %v1451 = vunpack.c.l.b16 %v262
        %v1452 = vunpack.c.l.b16 %v263
        %v1453 = vunpack.c.l.b16 %v264
        %v1454 = vpack.c.b16 %v1451, %v1450
        %v1455 = vpack.c.b16 %v1453, %v1452
        %v1459 = vsel %vm289, %v1441, 0
        %1461 = vmatprep.subr.bf16.mxu0 0
        %1462 = vmatpush1.bf16.msra.mxu0 %v1454
        %1463 = vmatprep.subr.bf16.mxu0 0
        %1464 = vmatpush1.bf16.msra.mxu0 %v1455
        %1465 = vmatprep.subr.bf16.mxu0 0
        %1466 = vmatpush1.bf16.msra.mxu0 0
        %1467 = vmatprep.subr.bf16.mxu0 0
        %1468 = vmatpush1.bf16.msra.mxu0 0
        %1469 = vmatprep.subr.bf16.mxu0 0
        %1470 = vmatpush1.bf16.msra.mxu0 0
        %1471 = vmatprep.subr.bf16.mxu0 0
        %1472 = vmatpush1.bf16.msra.mxu0 0
        %1473 = vmatprep.subr.bf16.mxu0 0
        %1474 = vmatpush1.bf16.msra.mxu0 0
        %1475 = vmatprep.subr.bf16.mxu0 0
        %1476 = vmatpush1.bf16.msra.mxu0 0
        %1477 = vmatprep.subr.bf16.mxu0 0
        %1478 = vmatpush1.bf16.msra.mxu0 0
        %1479 = vmatprep.subr.bf16.mxu0 0
        %1480 = vmatpush1.bf16.msra.mxu0 0
        %1481 = vmatprep.subr.bf16.mxu0 0
        %1482 = vmatpush1.bf16.msra.mxu0 0
        %1483 = vmatprep.subr.bf16.mxu0 0
        %1484 = vmatpush1.bf16.msra.mxu0 0
        %1485 = vmatprep.subr.bf16.mxu0 0
        %1486 = vmatpush1.bf16.msra.mxu0 0
        %1487 = vmatprep.subr.bf16.mxu0 0
        %1488 = vmatpush1.bf16.msra.mxu0 0
        %1489 = vmatprep.subr.bf16.mxu0 0
        %1490 = vmatpush1.bf16.msra.mxu0 0
        %1491 = vmatprep.subr.bf16.mxu0 0
        %1492 = vmatpush1.bf16.msra.mxu0 0
        %1493 = vmatprep.mubr.bf16.mxu0 0
        %1494 = vmatmul.mubr.bf16.gmra.mrb[0].mxu0 %v1459
        %v1495 = vpop.f32.mrb[0].mxu0
        %v1496 = vadd.f32 %v1445, %v1495
        %v1497 = vpop.f32.mrb[0].mxu0
        %v1498 = vpop.f32.mrb[0].mxu0
        %v1499 = vadd.f32 %v1445, %v1498
        %v1500 = vpop.f32.mrb[0].mxu0
        %1501 = vdwg.mxu0
        %v1502 = vmul.f32 %v1496, 0.5
        %v1503 = vmul.f32 %v1499, 0.5
        %v1504 = vmul.f32 %v1496, 0.70710677
        %v1505 = vmul.f32 %v1499, 0.70710677
        %v1506 = verf.f32.pop %v1504
        %v1507 = verf.f32.pop %v1505
        %v1508 = vadd.f32 %v1506, 1.0
        %v1509 = vadd.f32 %v1507, 1.0
        %v1510 = vmul.f32 %v1502, %v1508
        %v1511 = vmul.f32 %v1503, %v1509
        %v1512 = vpack.c.bf16 %v1511, %v1510
        %v1529 = vunpack.c.l.b16 %v269
        %v1530 = vunpack.c.l.b16 %v270
        %v1531 = vunpack.c.l.b16 %v271
        %v1532 = vunpack.c.l.b16 %v272
        %v1533 = vunpack.c.l.b16 %v273
        %v1534 = vunpack.c.l.b16 %v274
        %v1535 = vunpack.c.l.b16 %v275
        %v1536 = vunpack.c.l.b16 %v276
        %v1537 = vunpack.c.l.b16 %v277
        %v1538 = vunpack.c.l.b16 %v278
        %v1539 = vunpack.c.l.b16 %v279
        %v1540 = vunpack.c.l.b16 %v280
        %v1541 = vunpack.c.l.b16 %v281
        %v1542 = vunpack.c.l.b16 %v282
        %v1543 = vunpack.c.l.b16 %v283
        %v1544 = vunpack.c.l.b16 %v284
        %v1545 = vpack.c.b16 %v1530, %v1529
        %v1546 = vpack.c.b16 %v1532, %v1531
        %v1547 = vpack.c.b16 %v1534, %v1533
        %v1548 = vpack.c.b16 %v1536, %v1535
        %v1549 = vpack.c.b16 %v1538, %v1537
        %v1550 = vpack.c.b16 %v1540, %v1539
        %v1551 = vpack.c.b16 %v1542, %v1541
        %v1552 = vpack.c.b16 %v1544, %v1543
        %1561 = vmatprep.subr.bf16.mxu0 0
        %1562 = vmatpush1.bf16.msra.mxu0 %v1545
        %1563 = vmatprep.subr.bf16.mxu0 0
        %1564 = vmatpush1.bf16.msra.mxu0 %v1546
        %1565 = vmatprep.subr.bf16.mxu0 0
        %1566 = vmatpush1.bf16.msra.mxu0 %v1547
        %1567 = vmatprep.subr.bf16.mxu0 0
        %1568 = vmatpush1.bf16.msra.mxu0 %v1548
        %1569 = vmatprep.subr.bf16.mxu0 0
        %1570 = vmatpush1.bf16.msra.mxu0 %v1549
        %1571 = vmatprep.subr.bf16.mxu0 0
        %1572 = vmatpush1.bf16.msra.mxu0 %v1550
        %1573 = vmatprep.subr.bf16.mxu0 0
        %1574 = vmatpush1.bf16.msra.mxu0 %v1551
        %1575 = vmatprep.subr.bf16.mxu0 0
        %1576 = vmatpush1.bf16.msra.mxu0 %v1552
        %1577 = vmatprep.subr.bf16.mxu0 0
        %1578 = vmatpush1.bf16.msra.mxu0 0
        %1579 = vmatprep.subr.bf16.mxu0 0
        %1580 = vmatpush1.bf16.msra.mxu0 0
        %1581 = vmatprep.subr.bf16.mxu0 0
        %1582 = vmatpush1.bf16.msra.mxu0 0
        %1583 = vmatprep.subr.bf16.mxu0 0
        %1584 = vmatpush1.bf16.msra.mxu0 0
        %1585 = vmatprep.subr.bf16.mxu0 0
        %1586 = vmatpush1.bf16.msra.mxu0 0
        %1587 = vmatprep.subr.bf16.mxu0 0
        %1588 = vmatpush1.bf16.msra.mxu0 0
        %1589 = vmatprep.subr.bf16.mxu0 0
        %1590 = vmatpush1.bf16.msra.mxu0 0
        %1591 = vmatprep.subr.bf16.mxu0 0
        %1592 = vmatpush1.bf16.msra.mxu0 0
        %1593 = vmatprep.mubr.bf16.mxu0 0
        %1594 = vmatmul.mubr.bf16.gmra.mrb[0].mxu0 %v1512
        %v1595 = vpop.f32.mrb[0].mxu0
        %v1596 = vadd.f32 0.0, %v1595
        %v1597 = vpop.f32.mrb[0].mxu0
        %v1598 = vpop.f32.mrb[0].mxu0
        %v1599 = vadd.f32 0.0, %v1598
        %v1600 = vpop.f32.mrb[0].mxu0
        %1601 = vdwg.mxu0
        %v1602 = vadd.f32 %v1401, %v1596
        %v1603 = vadd.f32 %v1402, %v1599
        %v1604 = vlaneseq
        %v1605 = vshrl.u32 %v1604, 7
        %v1606 = vsub.s32 7, %v1605
        %v1607 = vrot.slane %v287, %v1606
        %v1608 = vadd.f32 %v1602, %v1607
        %v1609 = vadd.f32 %v1603, %v1607
        %v1610 = vsel %vm289, %v1608, 0.0
        %1611 = vadd.xlane.f32.xlu0 %v1610
        %v1612 = vpop.xlane.xlu0 %1611
        %v1613 = vsel %vm289, %v1609, 0.0
        %1614 = vadd.xlane.f32.xlu0 %v1613
        %v1615 = vpop.xlane.xlu0 %1614
        %v1616 = vmul.f32 %v1612, %v296
        %v1617 = vmul.f32 %v1615, %v296
        %v1618 = vsub.f32 %v1608, %v1616
        %v1619 = vsub.f32 %v1609, %v1617
        %v1620 = vmul.f32 %v1618, %v1618
        %v1621 = vmul.f32 %v1619, %v1619
        %v1622 = vsel %vm289, %v1620, 0.0
        %1623 = vadd.xlane.f32.xlu0 %v1622
        %v1624 = vpop.xlane.xlu0 %1623
        %v1625 = vsel %vm289, %v1621, 0.0
        %1626 = vadd.xlane.f32.xlu0 %v1625
        %v1627 = vpop.xlane.xlu0 %1626
        %v1628 = vmul.f32 %v1624, %v296
        %v1629 = vmul.f32 %v1627, %v296
        %v1630 = vadd.f32 %v1628, 1e-05
        %v1631 = vadd.f32 %v1629, 1e-05
        %v1632 = vrsqrt.pop %v1630
        %v1633 = vrsqrt.pop %v1631
        %v1634 = vmul.f32 %v1618, %v1632
        %v1635 = vmul.f32 %v1619, %v1633
        %v1636 = vlaneseq
        %v1637 = vshrl.u32 %v1636, 7
        %v1638 = vsub.s32 0, %v1637
        %v1639 = vrot.slane %v288, %v1638
        %v1640 = vmul.f32 %v1634, %v1639
        %v1641 = vmul.f32 %v1635, %v1639
        %v1642 = vlaneseq
        %v1643 = vshrl.u32 %v1642, 7
        %v1644 = vsub.s32 1, %v1643
        %v1645 = vrot.slane %v288, %v1644
        %v1646 = vadd.f32 %v1640, %v1645
        %v1647 = vadd.f32 %v1641, %v1645
        %v1648 = vpack.c.bf16 %v1647, %v1646
        %v1649 = vlaneseq
        %v1650 = vshrl.u32 %v1649, 7
        %v1651 = vsub.s32 2, %v1650
        %v1652 = vrot.slane %v288, %v1651
        %v1657 = vunpack.c.l.b16 %v265
        %v1658 = vunpack.c.l.b16 %v266
        %v1659 = vunpack.c.l.b16 %v267
        %v1660 = vunpack.c.l.b16 %v268
        %v1661 = vpack.c.b16 %v1658, %v1657
        %v1662 = vpack.c.b16 %v1660, %v1659
        %v1666 = vsel %vm289, %v1648, 0
        %1668 = vmatprep.subr.bf16.mxu0 0
        %1669 = vmatpush1.bf16.msra.mxu0 %v1661
        %1670 = vmatprep.subr.bf16.mxu0 0
        %1671 = vmatpush1.bf16.msra.mxu0 %v1662
        %1672 = vmatprep.subr.bf16.mxu0 0
        %1673 = vmatpush1.bf16.msra.mxu0 0
        %1674 = vmatprep.subr.bf16.mxu0 0
        %1675 = vmatpush1.bf16.msra.mxu0 0
        %1676 = vmatprep.subr.bf16.mxu0 0
        %1677 = vmatpush1.bf16.msra.mxu0 0
        %1678 = vmatprep.subr.bf16.mxu0 0
        %1679 = vmatpush1.bf16.msra.mxu0 0
        %1680 = vmatprep.subr.bf16.mxu0 0
        %1681 = vmatpush1.bf16.msra.mxu0 0
        %1682 = vmatprep.subr.bf16.mxu0 0
        %1683 = vmatpush1.bf16.msra.mxu0 0
        %1684 = vmatprep.subr.bf16.mxu0 0
        %1685 = vmatpush1.bf16.msra.mxu0 0
        %1686 = vmatprep.subr.bf16.mxu0 0
        %1687 = vmatpush1.bf16.msra.mxu0 0
        %1688 = vmatprep.subr.bf16.mxu0 0
        %1689 = vmatpush1.bf16.msra.mxu0 0
        %1690 = vmatprep.subr.bf16.mxu0 0
        %1691 = vmatpush1.bf16.msra.mxu0 0
        %1692 = vmatprep.subr.bf16.mxu0 0
        %1693 = vmatpush1.bf16.msra.mxu0 0
        %1694 = vmatprep.subr.bf16.mxu0 0
        %1695 = vmatpush1.bf16.msra.mxu0 0
        %1696 = vmatprep.subr.bf16.mxu0 0
        %1697 = vmatpush1.bf16.msra.mxu0 0
        %1698 = vmatprep.subr.bf16.mxu0 0
        %1699 = vmatpush1.bf16.msra.mxu0 0
        %1700 = vmatprep.mubr.bf16.mxu0 0
        %1701 = vmatmul.mubr.bf16.gmra.mrb[0].mxu0 %v1666
        %v1702 = vpop.f32.mrb[0].mxu0
        %v1703 = vadd.f32 %v1652, %v1702
        %v1704 = vpop.f32.mrb[0].mxu0
        %v1705 = vpop.f32.mrb[0].mxu0
        %v1706 = vadd.f32 %v1652, %v1705
        %v1707 = vpop.f32.mrb[0].mxu0
        %1708 = vdwg.mxu0
        %v1709 = vmax.f32 %v1703, 0.0
        %v1710 = vmax.f32 %v1706, 0.0
        %v1711 = vpack.c.bf16 %v1710, %v1709
        %v1714 = vunpack.c.l.b16 %v285
        %v1715 = vunpack.c.l.b16 %v286
        %v1716 = vpack.c.b16 %v1715, %v1714
        %v1719 = vsel %vm1334, %v1711, 0
        %1721 = vmatprep.subr.bf16.mxu0 0
        %1722 = vmatpush1.bf16.msra.mxu0 %v1716
        %1723 = vmatprep.subr.bf16.mxu0 0
        %1724 = vmatpush1.bf16.msra.mxu0 0
        %1725 = vmatprep.subr.bf16.mxu0 0
        %1726 = vmatpush1.bf16.msra.mxu0 0
        %1727 = vmatprep.subr.bf16.mxu0 0
        %1728 = vmatpush1.bf16.msra.mxu0 0
        %1729 = vmatprep.subr.bf16.mxu0 0
        %1730 = vmatpush1.bf16.msra.mxu0 0
        %1731 = vmatprep.subr.bf16.mxu0 0
        %1732 = vmatpush1.bf16.msra.mxu0 0
        %1733 = vmatprep.subr.bf16.mxu0 0
        %1734 = vmatpush1.bf16.msra.mxu0 0
        %1735 = vmatprep.subr.bf16.mxu0 0
        %1736 = vmatpush1.bf16.msra.mxu0 0
        %1737 = vmatprep.subr.bf16.mxu0 0
        %1738 = vmatpush1.bf16.msra.mxu0 0
        %1739 = vmatprep.subr.bf16.mxu0 0
        %1740 = vmatpush1.bf16.msra.mxu0 0
        %1741 = vmatprep.subr.bf16.mxu0 0
        %1742 = vmatpush1.bf16.msra.mxu0 0
        %1743 = vmatprep.subr.bf16.mxu0 0
        %1744 = vmatpush1.bf16.msra.mxu0 0
        %1745 = vmatprep.subr.bf16.mxu0 0
        %1746 = vmatpush1.bf16.msra.mxu0 0
        %1747 = vmatprep.subr.bf16.mxu0 0
        %1748 = vmatpush1.bf16.msra.mxu0 0
        %1749 = vmatprep.subr.bf16.mxu0 0
        %1750 = vmatpush1.bf16.msra.mxu0 0
        %1751 = vmatprep.subr.bf16.mxu0 0
        %1752 = vmatpush1.bf16.msra.mxu0 0
        %1753 = vmatprep.mubr.bf16.mxu0 0
        %1754 = vmatmul.mubr.bf16.gmra.mrb[0].mxu0 %v1719
        %v1755 = vpop.f32.mrb[0].mxu0
        %v1756 = vadd.f32 0.0, %v1755
        %v1757 = vpop.f32.mrb[0].mxu0
        %v1758 = vpop.f32.mrb[0].mxu0
        %v1759 = vadd.f32 0.0, %v1758
        %v1760 = vpop.f32.mrb[0].mxu0
        %1761 = vdwg.mxu0
        %v1762 = vadd.f32 %v1608, %v1756
        %v1763 = vadd.f32 %v1609, %v1759
        %v1764 = vlaneseq
        %v1765 = vshrl.u32 %v1764, 7
        %v1766 = vsub.s32 3, %v1765
        %v1767 = vrot.slane %v288, %v1766
        %v1768 = vadd.f32 %v1762, %v1767
        %v1769 = vadd.f32 %v1763, %v1767
        %1770 = vst.msk [vmem:[%s234] sm:$0xff] %vm289, %v1768
        %1771 = vst.msk [vmem:[%s234 + $0x8] sm:$0xff] %vm289, %v1769
        %s1772 = sand.u32 %s142, 1
        %s1773 = scalar_lea.sflag [#allocation3], %s1772
        %s1774 = sand.u32 %s142, 1
        %s1775 = smul.addr %s1774, 16
        %s1776 = scalar_lea.vmem [#allocation2], %s1775
        // Predicated region
        $region41: #{tpu_custom_call.1} parent=39 // pred_check
          %p1777 = pneg %p152
        $region42: #{tpu_custom_call.1} parent=39 // pred_check_branch
          %1779 = sbr.rel (%p1777) target = $region44
        $region43: #{tpu_custom_call.1} parent=39 // pred_region
          %s1780 = smul.u32 2, %s19
          %s1782 = ssub.s32 256, 256
          %1783 = vsyncadd %s1773, %s1782
          %s1784 = smul.addr %s1780, 128
          %s1785 = scalar_lea.hbm %s5, %s1784
          %s1786 = sshll.u32 %s1776, 4
          %s1787 = int_to_ptr.vmem [resolvable:$true] %s1786
          %1792 = dma.vmem_to_hbm [thread:$0]  %s1787, 256, %s1785, %s1773, 128, 128, 8
        $region44: #{tpu_custom_call.1} parent=39 // pred_fallthru
          _
      $region40: #{tpu_custom_call.1} parent=5 // pred_fallthru
        _
      %p1793 = scmp.le.s32.totalorder 2, %s14
      // Predicated region
      $region45: #{tpu_custom_call.1} parent=5 // pred_check
        %p1794 = pneg %p1793
      $region46: #{tpu_custom_call.1} parent=5 // pred_check_branch
        %1796 = sbr.rel (%p1794) target = $region48
      $region47: #{tpu_custom_call.1} parent=5 // pred_region
        %s1797 = ssub.s32 %s14, 2
        // Predicated region
        $region49: #{tpu_custom_call.1} parent=47 // pred_check
          %p1798 = pneg %p158
        $region50: #{tpu_custom_call.1} parent=47 // pred_check_branch
          %1800 = sbr.rel (%p1798) target = $region52
        $region51: #{tpu_custom_call.1} parent=47 // pred_region
          %s1801 = sand.u32 %s143, 1
          %s1802 = scalar_lea.sflag [#allocation3], %s1801
          %s1803 = sand.u32 %s143, 1
          %s1804 = smul.addr %s1803, 16
          %s1805 = scalar_lea.vmem [#allocation2], %s1804
          %1806 = dma.done %s1802, 256
        $region52: #{tpu_custom_call.1} parent=47 // pred_fallthru
          _
      $region48: #{tpu_custom_call.1} parent=5 // pred_fallthru
        _
    $region6: #{tpu_custom_call.1} parent=1 // loop_footer
      %s18 = sadd.s32 1, %s14
    $region7: #{tpu_custom_call.1} parent=1 // loop_footer_branch
      %13 = sbr.rel target = $region3
    $region8: #{tpu_custom_call.1} parent=1 // loop_exit
      _
    %1807 = vsyncpa [#allocation3], 1
    %s1808 = scalar_lea.sflag [#allocation3], 1
    %1809 = vsyncpa %s1808, 1

</llo_original>
